<compile_context>
chip_gen: v7x
topology: tpu7x:2x2x1
jax: 0.10.0
libtpu: 0.0.40
codegen_flags: <defaults>
</compile_context>

<pallas_src>
import numpy as np
import jax
import jax.numpy as jnp
from jax.experimental import pallas as pl
from jax.experimental.pallas import tpu as pltpu

# ----------------------- module hyper-parameters (defaults) -----------------------
GEO_FEAT_DIM = 128
D_HIDDEN = 128                       # d_hidden
N_HIDDEN_LAYERS = 1                  # n_layers=1 -> two linear layers total
NUM_LODS = 16
FEAT_DIM = 2                         # n_features_per_level
LOG2_HASHMAP = 18                    # codebook_bitwidth
HASHMAP_SIZE = 1 << LOG2_HASHMAP
BASE_RES = 16                        # min_width_codebook
MAX_RES = 1 << 12                    # max_width_codebook
PER_LEVEL_SCALE = float(np.exp((np.log(MAX_RES) - np.log(BASE_RES)) / NUM_LODS))

D_HASH = NUM_LODS * FEAT_DIM         # 32
D_ENC = 3 + D_HASH                   # include_xyz: 35
D_OUT = 1 + GEO_FEAT_DIM             # 129
SOFTPLUS_BETA = 100.0
SOFTPLUS_THRESHOLD = 20.0            # torch.nn.Softplus default threshold (in beta*x units)

_PRIMES = (np.uint32(1), np.uint32(2654435761), np.uint32(805459861))


# --------------------------------- Pallas kernel ----------------------------------

def _sdf_mlp_kernel(x_ref, f_ref, w0x_ref, w0h_ref, b0_ref,
                    w1g_ref, w1s_ref, b1g_ref, b1s_ref,
                    sdf_ref, geo_ref):
    """Fused VanillaMLP head: Linear -> Softplus(beta=100) -> Linear (Identity).

    Layer 0 is split into an f32 xyz path (K=3, include_xyz remap folded into the
    weights) and a bf16 hash-feature path (K=32); both accumulate in f32 on the MXU.
    Layer 1 is split into a lane-dense geo-feature matmul (bf16 output) and a
    1-wide sdf matmul (f32 output).
    """
    # Layer 0.
    h = jnp.dot(x_ref[...], w0x_ref[...], preferred_element_type=jnp.float32)
    h = h + jnp.dot(f_ref[...].astype(jnp.bfloat16), w0h_ref[...],
                    preferred_element_type=jnp.float32)
    h = h + b0_ref[...]

    # Softplus(beta=100) with torch semantics (threshold compared on beta*x).
    bh = h * SOFTPLUS_BETA
    soft = jnp.log(1.0 + jnp.exp(jnp.minimum(bh, SOFTPLUS_THRESHOLD))) * (1.0 / SOFTPLUS_BETA)
    h = jnp.where(bh > SOFTPLUS_THRESHOLD, h, soft)

    # Layer 1: split outputs (lane-dense geo block + 1-wide sdf column).
    hb = h.astype(jnp.bfloat16)
    geo = jnp.dot(hb, w1g_ref[...], preferred_element_type=jnp.float32) + b1g_ref[...]
    sdf = jnp.dot(hb, w1s_ref[...], preferred_element_type=jnp.float32) + b1s_ref[...]
    geo_ref[...] = geo.astype(geo_ref.dtype)
    sdf_ref[...] = sdf.astype(sdf_ref.dtype)


def _choose_tile_n(n, max_tile=4096, min_tile=256):
    """Pick the row tile: prefer an exact divisor of n (multiple of 8, grid >= 2)
    so no batch padding or output post-slice is needed; otherwise fall back to a
    power-of-two tile (>= min_tile) with minimal padding."""
    if n >= 2 * min_tile:
        upper = min(max_tile, (n // 2) // 8 * 8)
        for cand in range(upper, min_tile - 1, -8):
            if n % cand == 0:
                return cand
    t = max_tile
    while t > min_tile and 2 * t > n:
        t //= 2
    return t


def sdf_mlp_pallas(x, feats, mlp_params, *, max_tile=4096):
    """Run the fused MLP head on raw points + hash features. Handles any batch size.

    x:     (N, 3)  f32 points in [0, 1]
    feats: (N, 32) f32 hash-grid features
    Returns (sdf (N,1) f32, geo_feat (N,128) bf16).
    """
    w0, b0, w1, b1 = mlp_params
    n, dx = x.shape
    assert dx == 3 and feats.shape[-1] == D_HASH and w0.shape == (D_ENC, D_HIDDEN)

    # Fold the include_xyz remap (enc_xyz = 2*x - 1) into layer-0 params:
    #   (2x - 1) @ W0[:3] == x @ (2 * W0[:3]) - sum(W0[:3], axis=0)
    w0x = (2.0 * w0[:3]).astype(jnp.float32)                       # (3, 128), f32 xyz path
    w0h = w0[3:].astype(jnp.bfloat16)                              # (32, 128), bf16 MXU operand
    b0e = (b0 - jnp.sum(w0[:3], axis=0, keepdims=True)).astype(jnp.float32)

    # Split layer 1 into the sdf column and the lane-dense geo-feature block.
    w1s = w1[:, :1].astype(jnp.bfloat16)                           # (128, 1)
    w1g = w1[:, 1:].astype(jnp.bfloat16)                           # (128, 128)
    b1s = b1[:, :1].astype(jnp.float32)
    b1g = b1[:, 1:].astype(jnp.float32)

    tile_n = _choose_tile_n(n, max_tile=max_tile)
    n_pad = pl.cdiv(n, tile_n) * tile_n
    if n_pad != n:   # only when no suitable exact-divisor tile exists
        x = jnp.pad(x, ((0, n_pad - n), (0, 0)))
        feats = jnp.pad(feats, ((0, n_pad - n), (0, 0)))

    grid = (n_pad // tile_n,)

    sdf, geo = pl.pallas_call(
        _sdf_mlp_kernel,
        out_shape=(jax.ShapeDtypeStruct((n_pad, 1), jnp.float32),
                   jax.ShapeDtypeStruct((n_pad, GEO_FEAT_DIM), jnp.bfloat16)),
        grid_spec=pltpu.PrefetchScalarGridSpec(
            num_scalar_prefetch=0,
            grid=grid,
            in_specs=[
                pl.BlockSpec((tile_n, 3), lambda i: (i, 0)),
                pl.BlockSpec((tile_n, D_HASH), lambda i: (i, 0)),
                pl.BlockSpec((3, D_HIDDEN), lambda i: (0, 0)),
                pl.BlockSpec((D_HASH, D_HIDDEN), lambda i: (0, 0)),
                pl.BlockSpec((1, D_HIDDEN), lambda i: (0, 0)),
                pl.BlockSpec((D_HIDDEN, GEO_FEAT_DIM), lambda i: (0, 0)),
                pl.BlockSpec((D_HIDDEN, 1), lambda i: (0, 0)),
                pl.BlockSpec((1, GEO_FEAT_DIM), lambda i: (0, 0)),
                pl.BlockSpec((1, 1), lambda i: (0, 0)),
            ],
            out_specs=[
                pl.BlockSpec((tile_n, 1), lambda i: (i, 0)),
                pl.BlockSpec((tile_n, GEO_FEAT_DIM), lambda i: (i, 0)),
            ],
        ),
        compiler_params=pltpu.CompilerParams(
            dimension_semantics=("parallel",)),
    )(x.astype(jnp.float32), feats.astype(jnp.float32),
      w0x, w0h, b0e, w1g, w1s, b1g, b1s)

    if n_pad != n:
        sdf, geo = sdf[:n], geo[:n]
    return sdf, geo


# --------------------------- HashGrid encoding (plain JAX) -------------------------

def hash_grid_encode(x01, table):
    """tcnn-style multiresolution hash grid, Smoothstep interpolation, prime hash.

    x01:   (N, 3) points in [0, 1]
    table: (NUM_LODS, HASHMAP_SIZE, FEAT_DIM) feature codebook
    """
    n = x01.shape[0]
    feats = []
    for lvl in range(NUM_LODS):
        scale = BASE_RES * (PER_LEVEL_SCALE ** lvl) - 1.0
        pos = x01 * scale + 0.5
        p0 = jnp.floor(pos)
        frac = pos - p0
        # Smoothstep interpolation weights.
        w = frac * frac * (3.0 - 2.0 * frac)
        p0u = p0.astype(jnp.uint32)
        level_feats = jnp.zeros((n, FEAT_DIM), jnp.float32)
        for corner in range(8):
            bits = np.array([(corner >> d) & 1 for d in range(3)], dtype=np.float32)
            cpos = p0u + jnp.asarray(bits.astype(np.uint32))
            idx = (cpos[:, 0] * _PRIMES[0]) ^ (cpos[:, 1] * _PRIMES[1]) ^ (cpos[:, 2] * _PRIMES[2])
            idx = idx & jnp.uint32(HASHMAP_SIZE - 1)
            wsel = bits[None, :] * w + (1.0 - bits[None, :]) * (1.0 - w)
            cw = jnp.prod(wsel, axis=-1, keepdims=True)
            level_feats = level_feats + cw * jnp.take(table[lvl], idx, axis=0)
        feats.append(level_feats)
    return jnp.concatenate(feats, axis=-1)


def encode(x, table):
    # CompositeEncoding: prepend xyz remapped to [-1, 1] (include_xyz=True).
    # Only used by the pure-JAX reference; the Pallas path folds the remap into W0.
    return jnp.concatenate([x * 2.0 - 1.0, hash_grid_encode(x, table)], axis=-1)


# ---------------------------------- forward passes ---------------------------------

def sdf_network_forward(inputs, mlp_params, hash_table, *, max_tile=4096):
    """Fast path: returns (sdf (N,1) f32, geo_feat (N,128) bf16).

    Equivalent to the module's forward() split as out[:, :1] / out[:, 1:]."""
    x = inputs.reshape(-1, inputs.shape[-1])
    feats = hash_grid_encode(x, hash_table)          # (N, 32) f32, plain JAX (see TODO above)
    return sdf_mlp_pallas(x, feats, mlp_params, max_tile=max_tile)


def sdf_network_forward_concat(inputs, mlp_params, hash_table, *, max_tile=4096):
    """Compatibility path: single (N, 1 + geo_feat_dim) f32 tensor like the module."""
    sdf, geo = sdf_network_forward(inputs, mlp_params, hash_table, max_tile=max_tile)
    return jnp.concatenate([sdf, geo.astype(sdf.dtype)], axis=-1)


def reference_forward(inputs, mlp_params, hash_table):
    """Pure-JAX f32 reference of the same forward pass."""
    w0, b0, w1, b1 = mlp_params
    x = inputs.reshape(-1, inputs.shape[-1])
    enc = encode(x, hash_table)
    h = jnp.dot(enc, w0, precision="highest") + b0
    bh = h * SOFTPLUS_BETA
    soft = jnp.log(1.0 + jnp.exp(jnp.minimum(bh, SOFTPLUS_THRESHOLD))) * (1.0 / SOFTPLUS_BETA)
    h = jnp.where(bh > SOFTPLUS_THRESHOLD, h, soft)
    return jnp.dot(h, w1, precision="highest") + b1


def init_params(seed=42):
    key = jax.random.PRNGKey(seed)
    k0, kb0, k1, kb1, kt = jax.random.split(key, 5)
    w0 = jax.random.normal(k0, (D_ENC, D_HIDDEN), jnp.float32) / np.sqrt(D_ENC)
    b0 = jax.random.normal(kb0, (1, D_HIDDEN), jnp.float32) * 0.01
    w1 = jax.random.normal(k1, (D_HIDDEN, D_OUT), jnp.float32) / np.sqrt(D_HIDDEN)
    b1 = jax.random.normal(kb1, (1, D_OUT), jnp.float32) * 0.01
    table = jax.random.normal(kt, (NUM_LODS, HASHMAP_SIZE, FEAT_DIM), jnp.float32) * 0.1
    return (w0, b0, w1, b1), table


# -------------------------------------- main ---------------------------------------

if __name__ == "__main__":
    key = jax.random.PRNGKey(0)
    N = 1000  # not a power of two: exercises the adaptive-tile / padding logic

    # Points in [0, 1]^3 (the hash grid's expected domain).
    inputs = jax.random.uniform(key, (N, 3), jnp.float32)

    mlp_params, hash_table = init_params()

    fwd = jax.jit(sdf_network_forward)
    ref_fwd = jax.jit(reference_forward)

    sdf, geo = fwd(inputs, mlp_params, hash_table)
    jax.block_until_ready((sdf, geo))
    ref = jax.block_until_ready(ref_fwd(inputs, mlp_params, hash_table))

    assert sdf.shape == (N, 1), sdf.shape
    assert geo.shape == (N, GEO_FEAT_DIM), geo.shape
    np.testing.assert_allclose(np.asarray(sdf), np.asarray(ref[:, :1]), rtol=2e-2, atol=2e-2)
    np.testing.assert_allclose(np.asarray(geo, dtype=np.float32), np.asarray(ref[:, 1:]),
                               rtol=2e-2, atol=2e-2)

    # Module-shaped (N, 129) output for API parity.
    full = jax.block_until_ready(jax.jit(sdf_network_forward_concat)(inputs, mlp_params, hash_table))
    assert full.shape == (N, D_OUT), full.shape

    print("KERNEL_OK")
</pallas_src>

<mosaic_0001>
module attributes {stable_mosaic.version = 11 : i64} {
  func.func @_sdf_mlp_kernel(%arg0: i32, %arg1: memref<256x3xf32, #tpu.memory_space<vmem>>, %arg2: memref<256x32xf32, #tpu.memory_space<vmem>>, %arg3: memref<3x128xf32, #tpu.memory_space<vmem>>, %arg4: memref<32x128xbf16, #tpu.memory_space<vmem>>, %arg5: memref<1x128xf32, #tpu.memory_space<vmem>>, %arg6: memref<128x128xbf16, #tpu.memory_space<vmem>>, %arg7: memref<128x1xbf16, #tpu.memory_space<vmem>>, %arg8: memref<1x128xf32, #tpu.memory_space<vmem>>, %arg9: memref<1x1xf32, #tpu.memory_space<vmem>>, %arg10: memref<256x1xf32, #tpu.memory_space<vmem>>, %arg11: memref<256x128xbf16, #tpu.memory_space<vmem>>) attributes {dimension_semantics = [#tpu.dimension_semantics<parallel>], iteration_bounds = array<i64: 4>, scalar_prefetch = 0 : i64, scratch_operands = 0 : i64, tpu.core_type = #tpu.core_type<tc>, window_params = [{transform_indices = @transform_0, window_bounds = array<i64: 256, 3>}, {transform_indices = @transform_1, window_bounds = array<i64: 256, 32>}, {pipeline_mode = #tpu.pipeline_mode<synchronous>, transform_indices = @transform_2, window_bounds = array<i64: 3, 128>}, {pipeline_mode = #tpu.pipeline_mode<synchronous>, transform_indices = @transform_3, window_bounds = array<i64: 32, 128>}, {pipeline_mode = #tpu.pipeline_mode<synchronous>, transform_indices = @transform_4, window_bounds = array<i64: 1, 128>}, {pipeline_mode = #tpu.pipeline_mode<synchronous>, transform_indices = @transform_5, window_bounds = array<i64: 128, 128>}, {pipeline_mode = #tpu.pipeline_mode<synchronous>, transform_indices = @transform_6, window_bounds = array<i64: 128, 1>}, {pipeline_mode = #tpu.pipeline_mode<synchronous>, transform_indices = @transform_7, window_bounds = array<i64: 1, 128>}, {pipeline_mode = #tpu.pipeline_mode<synchronous>, transform_indices = @transform_8, window_bounds = array<i64: 1, 1>}, {transform_indices = @transform_9, window_bounds = array<i64: 256, 1>}, {transform_indices = @transform_10, window_bounds = array<i64: 256, 128>}]} {
    %c0 = arith.constant 0 : index
    %c0_0 = arith.constant 0 : index
    %0 = vector.load %arg1[%c0, %c0_0] : memref<256x3xf32, #tpu.memory_space<vmem>>, vector<256x3xf32>
    %c0_1 = arith.constant 0 : index
    %c0_2 = arith.constant 0 : index
    %1 = vector.load %arg3[%c0_1, %c0_2] : memref<3x128xf32, #tpu.memory_space<vmem>>, vector<3x128xf32>
    %cst = arith.constant dense<0.000000e+00> : vector<256x128xf32>
    %2 = tpu.matmul %0, %1, %cst {dimension_numbers = #tpu.dot_dimension_numbers<[1], [0], [0], [1], [0, 0, 1, 1], [], []>} : vector<256x3xf32>, vector<3x128xf32>, vector<256x128xf32> -> vector<256x128xf32>
    %c0_3 = arith.constant 0 : index
    %c0_4 = arith.constant 0 : index
    %3 = vector.load %arg2[%c0_3, %c0_4] : memref<256x32xf32, #tpu.memory_space<vmem>>, vector<256x32xf32>
    %4 = arith.truncf %3 : vector<256x32xf32> to vector<256x32xbf16>
    %c0_5 = arith.constant 0 : index
    %c0_6 = arith.constant 0 : index
    %5 = vector.load %arg4[%c0_5, %c0_6] : memref<32x128xbf16, #tpu.memory_space<vmem>>, vector<32x128xbf16>
    %cst_7 = arith.constant dense<0.000000e+00> : vector<256x128xf32>
    %6 = tpu.matmul %4, %5, %cst_7 {dimension_numbers = #tpu.dot_dimension_numbers<[1], [0], [0], [1], [0, 0, 1, 1], [], []>} : vector<256x32xbf16>, vector<32x128xbf16>, vector<256x128xf32> -> vector<256x128xf32>
    %7 = arith.addf %2, %6 : vector<256x128xf32>
    %c0_8 = arith.constant 0 : index
    %c0_9 = arith.constant 0 : index
    %8 = vector.load %arg5[%c0_8, %c0_9] : memref<1x128xf32, #tpu.memory_space<vmem>>, vector<1x128xf32>
    %9 = vector.broadcast %8 : vector<1x128xf32> to vector<256x128xf32>
    %10 = arith.addf %7, %9 : vector<256x128xf32>
    %cst_10 = arith.constant 1.000000e+02 : f32
    %11 = vector.broadcast %cst_10 : f32 to vector<256x128xf32>
    %12 = arith.mulf %10, %11 : vector<256x128xf32>
    %cst_11 = arith.constant 2.000000e+01 : f32
    %13 = vector.broadcast %cst_11 : f32 to vector<256x128xf32>
    %14 = arith.minimumf %12, %13 : vector<256x128xf32>
    %15 = math.exp %14 : vector<256x128xf32>
    %cst_12 = arith.constant 1.000000e+00 : f32
    %16 = vector.broadcast %cst_12 : f32 to vector<256x128xf32>
    %17 = arith.addf %16, %15 : vector<256x128xf32>
    %18 = math.log %17 : vector<256x128xf32>
    %cst_13 = arith.constant 0.00999999977 : f32
    %19 = vector.broadcast %cst_13 : f32 to vector<256x128xf32>
    %20 = arith.mulf %18, %19 : vector<256x128xf32>
    %cst_14 = arith.constant 2.000000e+01 : f32
    %21 = vector.broadcast %cst_14 : f32 to vector<256x128xf32>
    %22 = arith.cmpf ogt, %12, %21 : vector<256x128xf32>
    %23 = arith.select %22, %10, %20 : vector<256x128xi1>, vector<256x128xf32>
    %24 = arith.truncf %23 : vector<256x128xf32> to vector<256x128xbf16>
    %c0_15 = arith.constant 0 : index
    %c0_16 = arith.constant 0 : index
    %25 = vector.load %arg6[%c0_15, %c0_16] : memref<128x128xbf16, #tpu.memory_space<vmem>>, vector<128x128xbf16>
    %cst_17 = arith.constant dense<0.000000e+00> : vector<256x128xf32>
    %26 = tpu.matmul %24, %25, %cst_17 {dimension_numbers = #tpu.dot_dimension_numbers<[1], [0], [0], [1], [0, 0, 1, 1], [], []>} : vector<256x128xbf16>, vector<128x128xbf16>, vector<256x128xf32> -> vector<256x128xf32>
    %c0_18 = arith.constant 0 : index
    %c0_19 = arith.constant 0 : index
    %27 = vector.load %arg8[%c0_18, %c0_19] : memref<1x128xf32, #tpu.memory_space<vmem>>, vector<1x128xf32>
    %28 = vector.broadcast %27 : vector<1x128xf32> to vector<256x128xf32>
    %29 = arith.addf %26, %28 : vector<256x128xf32>
    %c0_20 = arith.constant 0 : index
    %c0_21 = arith.constant 0 : index
    %30 = vector.load %arg7[%c0_20, %c0_21] : memref<128x1xbf16, #tpu.memory_space<vmem>>, vector<128x1xbf16>
    %cst_22 = arith.constant dense<0.000000e+00> : vector<256x1xf32>
    %31 = tpu.matmul %24, %30, %cst_22 {dimension_numbers = #tpu.dot_dimension_numbers<[1], [0], [0], [1], [0, 0, 1, 1], [], []>} : vector<256x128xbf16>, vector<128x1xbf16>, vector<256x1xf32> -> vector<256x1xf32>
    %c0_23 = arith.constant 0 : index
    %c0_24 = arith.constant 0 : index
    %32 = vector.load %arg9[%c0_23, %c0_24] : memref<1x1xf32, #tpu.memory_space<vmem>>, vector<1x1xf32>
    %33 = vector.broadcast %32 : vector<1x1xf32> to vector<256x1xf32>
    %34 = arith.addf %31, %33 : vector<256x1xf32>
    %35 = arith.truncf %29 : vector<256x128xf32> to vector<256x128xbf16>
    %c0_25 = arith.constant 0 : index
    %c0_26 = arith.constant 0 : index
    %36 = vector.load %arg11[%c0_25, %c0_26] : memref<256x128xbf16, #tpu.memory_space<vmem>>, vector<256x128xbf16>
    tpu.vector_store %arg11[%c0_25, %c0_26], %35 {strides = array<i32>} : memref<256x128xbf16, #tpu.memory_space<vmem>>, vector<256x128xbf16>,
    %c0_27 = arith.constant 0 : index
    %c0_28 = arith.constant 0 : index
    %37 = vector.load %arg10[%c0_27, %c0_28] : memref<256x1xf32, #tpu.memory_space<vmem>>, vector<256x1xf32>
    tpu.vector_store %arg10[%c0_27, %c0_28], %34 {strides = array<i32>} : memref<256x1xf32, #tpu.memory_space<vmem>>, vector<256x1xf32>,
    return
  }
  func.func @transform_0(%arg0: i32) -> (i32, i32) {
    %c0_i32 = arith.constant 0 : i32
    %c0_i32_0 = arith.constant 0 : i32
    return %arg0, %c0_i32 : i32, i32
  }
  func.func @transform_1(%arg0: i32) -> (i32, i32) {
    %c0_i32 = arith.constant 0 : i32
    %c0_i32_0 = arith.constant 0 : i32
    return %arg0, %c0_i32 : i32, i32
  }
  func.func @transform_2(%arg0: i32) -> (i32, i32) {
    %c0_i32 = arith.constant 0 : i32
    %c0_i32_0 = arith.constant 0 : i32
    %c0_i32_1 = arith.constant 0 : i32
    return %c0_i32, %c0_i32_0 : i32, i32
  }
  func.func @transform_3(%arg0: i32) -> (i32, i32) {
    %c0_i32 = arith.constant 0 : i32
    %c0_i32_0 = arith.constant 0 : i32
    %c0_i32_1 = arith.constant 0 : i32
    return %c0_i32, %c0_i32_0 : i32, i32
  }
  func.func @transform_4(%arg0: i32) -> (i32, i32) {
    %c0_i32 = arith.constant 0 : i32
    %c0_i32_0 = arith.constant 0 : i32
    %c0_i32_1 = arith.constant 0 : i32
    return %c0_i32, %c0_i32_0 : i32, i32
  }
  func.func @transform_5(%arg0: i32) -> (i32, i32) {
    %c0_i32 = arith.constant 0 : i32
    %c0_i32_0 = arith.constant 0 : i32
    %c0_i32_1 = arith.constant 0 : i32
    return %c0_i32, %c0_i32_0 : i32, i32
  }
  func.func @transform_6(%arg0: i32) -> (i32, i32) {
    %c0_i32 = arith.constant 0 : i32
    %c0_i32_0 = arith.constant 0 : i32
    %c0_i32_1 = arith.constant 0 : i32
    return %c0_i32, %c0_i32_0 : i32, i32
  }
  func.func @transform_7(%arg0: i32) -> (i32, i32) {
    %c0_i32 = arith.constant 0 : i32
    %c0_i32_0 = arith.constant 0 : i32
    %c0_i32_1 = arith.constant 0 : i32
    return %c0_i32, %c0_i32_0 : i32, i32
  }
  func.func @transform_8(%arg0: i32) -> (i32, i32) {
    %c0_i32 = arith.constant 0 : i32
    %c0_i32_0 = arith.constant 0 : i32
    %c0_i32_1 = arith.constant 0 : i32
    return %c0_i32, %c0_i32_0 : i32, i32
  }
  func.func @transform_9(%arg0: i32) -> (i32, i32) {
    %c0_i32 = arith.constant 0 : i32
    %c0_i32_0 = arith.constant 0 : i32
    return %arg0, %c0_i32 : i32, i32
  }
  func.func @transform_10(%arg0: i32) -> (i32, i32) {
    %c0_i32 = arith.constant 0 : i32
    %c0_i32_0 = arith.constant 0 : i32
    return %arg0, %c0_i32 : i32, i32
  }
}

</mosaic_0001>

<llo_original>
// kernel: sdf_network_forward.1
$region0: #{sdf_network_forward.1}
  #allocation0 [shape = 'u32[]', space=smem, size = 0x4, offset = 0x4, fixed_abs, tag = 'smem constant byte address 0x4 - core index']
  #allocation1 [shape = 'u32[144,128]{1,0:T(1,128)}', space=vmem, size = 0x12000, scoped, tag = 'internal scratch']
  #allocation2 [shape = 'f32[1,1]{1,0:T(1,128)S(1)}', space=vmem, size = 0x200, scoped, tag = 'scoped memory for sdf_network_forward.1']
  %s0 = inlined_call_operand.vmem [shape: f32[1024,3], index: 0, kind: input, shape index: {}]
  %s1 = inlined_call_operand.vmem [shape: f32[1024,32], index: 1, kind: input, shape index: {}]
  %s2 = inlined_call_operand.vmem [shape: f32[3,128], index: 2, kind: input, shape index: {}]
  %s3 = inlined_call_operand.vmem [shape: bf16[32,128], index: 3, kind: input, shape index: {}]
  %s4 = inlined_call_operand.vmem [shape: f32[1,128], index: 4, kind: input, shape index: {}]
  %s5 = inlined_call_operand.vmem [shape: bf16[128,128], index: 5, kind: input, shape index: {}]
  %s6 = inlined_call_operand.vmem [shape: bf16[128,1], index: 6, kind: input, shape index: {}]
  %s7 = inlined_call_operand.vmem [shape: f32[1,128], index: 7, kind: input, shape index: {}]
  %s8 = inlined_call_operand.<no memory space> [shape: f32[1,1], index: 8, kind: input, shape index: {}]
  %s9 = inlined_call_operand.vmem [shape: f32[1024,1], index: 9, kind: output, shape index: {0}]
  %s10 = inlined_call_operand.vmem [shape: bf16[1024,128], index: 10, kind: output, shape index: {1}]
  %11 = xla_tuple %s9, %s10
  %s12 = sld [smem:[#allocation0]]
  $region77: #{sdf_network_forward.1} parent=0
    _
  %s14 = ssub.s32 1, %s12
  %s15 = scalar_select 0, %s14, %s12
  %v16 = vstv %s8
  %17 = vst [vmem:[#allocation2] sm:$0x1] %v16
  loop: start=0, step=1, limit=6
  $region2: #{sdf_network_forward.1} parent=0 // loop_pre_header
    _
  $region3: #{sdf_network_forward.1} parent=0 // loop_header
    %s19 = sphi 0, %s23
    %p20 = scmp.ge.s32.totalorder %s19, 6
    %s29 = sphi 0, %s31
    %s32 = sphi 0, %s29
    %s33 = sphi 0, %s32
    %s49 = sphi 0, %s33
    %s55 = sphi 0, %s57
    %s58 = sphi 0, %s55
    %s59 = sphi 0, %s58
    %s75 = sphi 0, %s59
    %s79 = sphi 0, %s79
    %s81 = sphi 0, %s79
    %s82 = sphi 0, %s81
    %s96 = sphi 0, %s82
    %s100 = sphi 0, %s100
    %s102 = sphi 0, %s100
    %s103 = sphi 0, %s102
    %s117 = sphi 0, %s103
    %s121 = sphi 0, %s121
    %s123 = sphi 0, %s121
    %s124 = sphi 0, %s123
    %s138 = sphi 0, %s124
    %s142 = sphi 0, %s142
    %s144 = sphi 0, %s142
    %s145 = sphi 0, %s144
    %s159 = sphi 0, %s145
    %s163 = sphi 0, %s163
    %s165 = sphi 0, %s163
    %s166 = sphi 0, %s165
    %s180 = sphi 0, %s166
    %s184 = sphi 0, %s184
    %s186 = sphi 0, %s184
    %s187 = sphi 0, %s186
    %s201 = sphi 0, %s187
    %s205 = sphi 0, %s205
    %s207 = sphi 0, %s205
    %s208 = sphi 0, %s207
    %s222 = sphi 0, %s208
    %s228 = sphi 0, %s230
    %s231 = sphi 0, %s228
    %s232 = sphi 0, %s231
    %s248 = sphi 0, %s232
    %s254 = sphi 0, %s256
    %s257 = sphi 0, %s254
    %s258 = sphi 0, %s257
    %s274 = sphi 0, %s258
  $region4: #{sdf_network_forward.1} parent=0 // loop_header_branch
    %22 = sbr.rel (%p20) target = $region8
  $region5: #{sdf_network_forward.1} parent=0 // loop_body
    %s24 = ssub.s32 %s19, 1
    %s25 = ssub.s32 %s19, 2
    %s26 = sadd.s32 %s19, 1
    %s27 = ssub.s32 %s19, %s26
    %p28 = scmp.eq.s32.totalorder %s27, 0
    %s30 = sadd.s32 %s29, 1
    %s31 = scalar_select %p28, %s29, %s30
    %p34 = pneg %p28
    %p35 = scmp.eq.s32.totalorder %s19, 3
    %p36 = por %p34, %p35
    %p37 = scmp.ne.s32.totalorder %s29, %s32
    %p38 = scmp.eq.s32.totalorder %s19, 0
    %p39 = por %p37, %p38
    %p40 = scmp.ne.s32.totalorder %s29, %s32
    %p41 = scmp.eq.s32.totalorder %s24, 3
    %p42 = por %p40, %p41
    %p43 = scmp.ne.s32.totalorder %s32, %s33
    %p44 = scmp.eq.s32.totalorder %s24, 0
    %p45 = por %p43, %p44
    %p46 = scmp.ne.s32.totalorder %s32, %s33
    %p47 = scmp.eq.s32.totalorder %s25, 3
    %p48 = por %p46, %p47
    %p50 = scmp.ne.s32.totalorder %s33, %s49
    %p51 = scmp.eq.s32.totalorder %s25, 0
    %p52 = por %p50, %p51
    %s53 = ssub.s32 %s19, %s26
    %p54 = scmp.eq.s32.totalorder %s53, 0
    %s56 = sadd.s32 %s55, 1
    %s57 = scalar_select %p54, %s55, %s56
    %p60 = pneg %p54
    %p61 = scmp.eq.s32.totalorder %s19, 3
    %p62 = por %p60, %p61
    %p63 = scmp.ne.s32.totalorder %s55, %s58
    %p64 = scmp.eq.s32.totalorder %s19, 0
    %p65 = por %p63, %p64
    %p66 = scmp.ne.s32.totalorder %s55, %s58
    %p67 = scmp.eq.s32.totalorder %s24, 3
    %p68 = por %p66, %p67
    %p69 = scmp.ne.s32.totalorder %s58, %s59
    %p70 = scmp.eq.s32.totalorder %s24, 0
    %p71 = por %p69, %p70
    %p72 = scmp.ne.s32.totalorder %s58, %s59
    %p73 = scmp.eq.s32.totalorder %s25, 3
    %p74 = por %p72, %p73
    %p76 = scmp.ne.s32.totalorder %s59, %s75
    %p77 = scmp.eq.s32.totalorder %s25, 0
    %p78 = por %p76, %p77
    %s80 = sadd.s32 %s79, 1
    %p83 = scmp.eq.s32.totalorder %s19, 3
    %p84 = scmp.ne.s32.totalorder %s79, %s81
    %p85 = scmp.eq.s32.totalorder %s19, 0
    %p86 = por %p84, %p85
    %p87 = scmp.ne.s32.totalorder %s79, %s81
    %p88 = scmp.eq.s32.totalorder %s24, 3
    %p89 = por %p87, %p88
    %p90 = scmp.ne.s32.totalorder %s81, %s82
    %p91 = scmp.eq.s32.totalorder %s24, 0
    %p92 = por %p90, %p91
    %p93 = scmp.ne.s32.totalorder %s81, %s82
    %p94 = scmp.eq.s32.totalorder %s25, 3
    %p95 = por %p93, %p94
    %p97 = scmp.ne.s32.totalorder %s82, %s96
    %p98 = scmp.eq.s32.totalorder %s25, 0
    %p99 = por %p97, %p98
    %s101 = sadd.s32 %s100, 1
    %p104 = scmp.eq.s32.totalorder %s19, 3
    %p105 = scmp.ne.s32.totalorder %s100, %s102
    %p106 = scmp.eq.s32.totalorder %s19, 0
    %p107 = por %p105, %p106
    %p108 = scmp.ne.s32.totalorder %s100, %s102
    %p109 = scmp.eq.s32.totalorder %s24, 3
    %p110 = por %p108, %p109
    %p111 = scmp.ne.s32.totalorder %s102, %s103
    %p112 = scmp.eq.s32.totalorder %s24, 0
    %p113 = por %p111, %p112
    %p114 = scmp.ne.s32.totalorder %s102, %s103
    %p115 = scmp.eq.s32.totalorder %s25, 3
    %p116 = por %p114, %p115
    %p118 = scmp.ne.s32.totalorder %s103, %s117
    %p119 = scmp.eq.s32.totalorder %s25, 0
    %p120 = por %p118, %p119
    %s122 = sadd.s32 %s121, 1
    %p125 = scmp.eq.s32.totalorder %s19, 3
    %p126 = scmp.ne.s32.totalorder %s121, %s123
    %p127 = scmp.eq.s32.totalorder %s19, 0
    %p128 = por %p126, %p127
    %p129 = scmp.ne.s32.totalorder %s121, %s123
    %p130 = scmp.eq.s32.totalorder %s24, 3
    %p131 = por %p129, %p130
    %p132 = scmp.ne.s32.totalorder %s123, %s124
    %p133 = scmp.eq.s32.totalorder %s24, 0
    %p134 = por %p132, %p133
    %p135 = scmp.ne.s32.totalorder %s123, %s124
    %p136 = scmp.eq.s32.totalorder %s25, 3
    %p137 = por %p135, %p136
    %p139 = scmp.ne.s32.totalorder %s124, %s138
    %p140 = scmp.eq.s32.totalorder %s25, 0
    %p141 = por %p139, %p140
    %s143 = sadd.s32 %s142, 1
    %p146 = scmp.eq.s32.totalorder %s19, 3
    %p147 = scmp.ne.s32.totalorder %s142, %s144
    %p148 = scmp.eq.s32.totalorder %s19, 0
    %p149 = por %p147, %p148
    %p150 = scmp.ne.s32.totalorder %s142, %s144
    %p151 = scmp.eq.s32.totalorder %s24, 3
    %p152 = por %p150, %p151
    %p153 = scmp.ne.s32.totalorder %s144, %s145
    %p154 = scmp.eq.s32.totalorder %s24, 0
    %p155 = por %p153, %p154
    %p156 = scmp.ne.s32.totalorder %s144, %s145
    %p157 = scmp.eq.s32.totalorder %s25, 3
    %p158 = por %p156, %p157
    %p160 = scmp.ne.s32.totalorder %s145, %s159
    %p161 = scmp.eq.s32.totalorder %s25, 0
    %p162 = por %p160, %p161
    %s164 = sadd.s32 %s163, 1
    %p167 = scmp.eq.s32.totalorder %s19, 3
    %p168 = scmp.ne.s32.totalorder %s163, %s165
    %p169 = scmp.eq.s32.totalorder %s19, 0
    %p170 = por %p168, %p169
    %p171 = scmp.ne.s32.totalorder %s163, %s165
    %p172 = scmp.eq.s32.totalorder %s24, 3
    %p173 = por %p171, %p172
    %p174 = scmp.ne.s32.totalorder %s165, %s166
    %p175 = scmp.eq.s32.totalorder %s24, 0
    %p176 = por %p174, %p175
    %p177 = scmp.ne.s32.totalorder %s165, %s166
    %p178 = scmp.eq.s32.totalorder %s25, 3
    %p179 = por %p177, %p178
    %p181 = scmp.ne.s32.totalorder %s166, %s180
    %p182 = scmp.eq.s32.totalorder %s25, 0
    %p183 = por %p181, %p182
    %s185 = sadd.s32 %s184, 1
    %p188 = scmp.eq.s32.totalorder %s19, 3
    %p189 = scmp.ne.s32.totalorder %s184, %s186
    %p190 = scmp.eq.s32.totalorder %s19, 0
    %p191 = por %p189, %p190
    %p192 = scmp.ne.s32.totalorder %s184, %s186
    %p193 = scmp.eq.s32.totalorder %s24, 3
    %p194 = por %p192, %p193
    %p195 = scmp.ne.s32.totalorder %s186, %s187
    %p196 = scmp.eq.s32.totalorder %s24, 0
    %p197 = por %p195, %p196
    %p198 = scmp.ne.s32.totalorder %s186, %s187
    %p199 = scmp.eq.s32.totalorder %s25, 3
    %p200 = por %p198, %p199
    %p202 = scmp.ne.s32.totalorder %s187, %s201
    %p203 = scmp.eq.s32.totalorder %s25, 0
    %p204 = por %p202, %p203
    %s206 = sadd.s32 %s205, 1
    %p209 = scmp.eq.s32.totalorder %s19, 3
    %p210 = scmp.ne.s32.totalorder %s205, %s207
    %p211 = scmp.eq.s32.totalorder %s19, 0
    %p212 = por %p210, %p211
    %p213 = scmp.ne.s32.totalorder %s205, %s207
    %p214 = scmp.eq.s32.totalorder %s24, 3
    %p215 = por %p213, %p214
    %p216 = scmp.ne.s32.totalorder %s207, %s208
    %p217 = scmp.eq.s32.totalorder %s24, 0
    %p218 = por %p216, %p217
    %p219 = scmp.ne.s32.totalorder %s207, %s208
    %p220 = scmp.eq.s32.totalorder %s25, 3
    %p221 = por %p219, %p220
    %p223 = scmp.ne.s32.totalorder %s208, %s222
    %p224 = scmp.eq.s32.totalorder %s25, 0
    %p225 = por %p223, %p224
    %s226 = ssub.s32 %s19, %s26
    %p227 = scmp.eq.s32.totalorder %s226, 0
    %s229 = sadd.s32 %s228, 1
    %s230 = scalar_select %p227, %s228, %s229
    %p233 = pneg %p227
    %p234 = scmp.eq.s32.totalorder %s19, 3
    %p235 = por %p233, %p234
    %p236 = scmp.ne.s32.totalorder %s228, %s231
    %p237 = scmp.eq.s32.totalorder %s19, 0
    %p238 = por %p236, %p237
    %p239 = scmp.ne.s32.totalorder %s228, %s231
    %p240 = scmp.eq.s32.totalorder %s24, 3
    %p241 = por %p239, %p240
    %p242 = scmp.ne.s32.totalorder %s231, %s232
    %p243 = scmp.eq.s32.totalorder %s24, 0
    %p244 = por %p242, %p243
    %p245 = scmp.ne.s32.totalorder %s231, %s232
    %p246 = scmp.eq.s32.totalorder %s25, 3
    %p247 = por %p245, %p246
    %p249 = scmp.ne.s32.totalorder %s232, %s248
    %p250 = scmp.eq.s32.totalorder %s25, 0
    %p251 = por %p249, %p250
    %s252 = ssub.s32 %s19, %s26
    %p253 = scmp.eq.s32.totalorder %s252, 0
    %s255 = sadd.s32 %s254, 1
    %s256 = scalar_select %p253, %s254, %s255
    %p259 = pneg %p253
    %p260 = scmp.eq.s32.totalorder %s19, 3
    %p261 = por %p259, %p260
    %p262 = scmp.ne.s32.totalorder %s254, %s257
    %p263 = scmp.eq.s32.totalorder %s19, 0
    %p264 = por %p262, %p263
    %p265 = scmp.ne.s32.totalorder %s254, %s257
    %p266 = scmp.eq.s32.totalorder %s24, 3
    %p267 = por %p265, %p266
    %p268 = scmp.ne.s32.totalorder %s257, %s258
    %p269 = scmp.eq.s32.totalorder %s24, 0
    %p270 = por %p268, %p269
    %p271 = scmp.ne.s32.totalorder %s257, %s258
    %p272 = scmp.eq.s32.totalorder %s25, 3
    %p273 = por %p271, %p272
    %p275 = scmp.ne.s32.totalorder %s258, %s274
    %p276 = scmp.eq.s32.totalorder %s25, 0
    %p277 = por %p275, %p276
    %p278 = scmp.le.s32.totalorder 1, %s19
    %p279 = scmp.lt.s32.totalorder %s19, 5
    %p280 = pnand %p278, %p279
    %p281 = pneg %p280
    // Predicated region
    $region9: #{sdf_network_forward.1} parent=5 // pred_check
      _
    $region10: #{sdf_network_forward.1} parent=5 // pred_check_branch
      %283 = sbr.rel (%p280) target = $region12
    $region11: #{sdf_network_forward.1} parent=5 // pred_region
      %s284 = ssub.s32 %s19, 1
      // Predicated region
      $region13: #{sdf_network_forward.1} parent=11 // pred_check
        %p285 = pneg %p92
      $region14: #{sdf_network_forward.1} parent=11 // pred_check_branch
        %287 = sbr.rel (%p285) target = $region16
      $region15: #{sdf_network_forward.1} parent=11 // pred_region
        _
      $region16: #{sdf_network_forward.1} parent=11 // pred_fallthru
        _
      // Predicated region
      $region17: #{sdf_network_forward.1} parent=11 // pred_check
        %p288 = pneg %p113
      $region18: #{sdf_network_forward.1} parent=11 // pred_check_branch
        %290 = sbr.rel (%p288) target = $region20
      $region19: #{sdf_network_forward.1} parent=11 // pred_region
        _
      $region20: #{sdf_network_forward.1} parent=11 // pred_fallthru
        _
      // Predicated region
      $region21: #{sdf_network_forward.1} parent=11 // pred_check
        %p291 = pneg %p134
      $region22: #{sdf_network_forward.1} parent=11 // pred_check_branch
        %293 = sbr.rel (%p291) target = $region24
      $region23: #{sdf_network_forward.1} parent=11 // pred_region
        _
      $region24: #{sdf_network_forward.1} parent=11 // pred_fallthru
        _
      // Predicated region
      $region25: #{sdf_network_forward.1} parent=11 // pred_check
        %p294 = pneg %p155
      $region26: #{sdf_network_forward.1} parent=11 // pred_check_branch
        %296 = sbr.rel (%p294) target = $region28
      $region27: #{sdf_network_forward.1} parent=11 // pred_region
        _
      $region28: #{sdf_network_forward.1} parent=11 // pred_fallthru
        _
      // Predicated region
      $region29: #{sdf_network_forward.1} parent=11 // pred_check
        %p297 = pneg %p176
      $region30: #{sdf_network_forward.1} parent=11 // pred_check_branch
        %299 = sbr.rel (%p297) target = $region32
      $region31: #{sdf_network_forward.1} parent=11 // pred_region
        _
      $region32: #{sdf_network_forward.1} parent=11 // pred_fallthru
        _
      // Predicated region
      $region33: #{sdf_network_forward.1} parent=11 // pred_check
        %p300 = pneg %p197
      $region34: #{sdf_network_forward.1} parent=11 // pred_check_branch
        %302 = sbr.rel (%p300) target = $region36
      $region35: #{sdf_network_forward.1} parent=11 // pred_region
        _
      $region36: #{sdf_network_forward.1} parent=11 // pred_fallthru
        _
      // Predicated region
      $region37: #{sdf_network_forward.1} parent=11 // pred_check
        %p303 = pneg %p218
      $region38: #{sdf_network_forward.1} parent=11 // pred_check_branch
        %305 = sbr.rel (%p303) target = $region40
      $region39: #{sdf_network_forward.1} parent=11 // pred_region
        _
      $region40: #{sdf_network_forward.1} parent=11 // pred_fallthru
        _
    $region12: #{sdf_network_forward.1} parent=5 // pred_fallthru
      _
    %p306 = scmp.lt.s32.totalorder %s19, 4
    // Predicated region
    $region41: #{sdf_network_forward.1} parent=5 // pred_check
      %p307 = pneg %p306
    $region42: #{sdf_network_forward.1} parent=5 // pred_check_branch
      %309 = sbr.rel (%p307) target = $region44
    $region43: #{sdf_network_forward.1} parent=5 // pred_region
      // Predicated region
      $region45: #{sdf_network_forward.1} parent=43 // pred_check
        %p310 = pneg %p39
      $region46: #{sdf_network_forward.1} parent=43 // pred_check_branch
        %312 = sbr.rel (%p310) target = $region48
      $region47: #{sdf_network_forward.1} parent=43 // pred_region
        %s313 = smul.u32 32, %s19
        %p314 = scmp.lt.s32.totalorder %s313, 127
        %s315 = scalar_select %p314, %s313, 127
        %s316 = smul.addr %s315, 8
        %s317 = scalar_lea.vmem %s0, %s316
        %s318 = smul.u32 32, %s19
      $region48: #{sdf_network_forward.1} parent=43 // pred_fallthru
        _
      // Predicated region
      $region49: #{sdf_network_forward.1} parent=43 // pred_check
        %p319 = pneg %p65
      $region50: #{sdf_network_forward.1} parent=43 // pred_check_branch
        %321 = sbr.rel (%p319) target = $region52
      $region51: #{sdf_network_forward.1} parent=43 // pred_region
        %s322 = smul.u32 32, %s19
        %p323 = scmp.lt.s32.totalorder %s322, 127
        %s324 = scalar_select %p323, %s322, 127
        %s325 = smul.addr %s324, 8
        %s326 = scalar_lea.vmem %s1, %s325
        %s327 = smul.u32 32, %s19
      $region52: #{sdf_network_forward.1} parent=43 // pred_fallthru
        _
    $region44: #{sdf_network_forward.1} parent=5 // pred_fallthru
      _
    %p328 = scmp.le.s32.totalorder 1, %s19
    %p329 = scmp.lt.s32.totalorder %s19, 5
    %p330 = pnand %p328, %p329
    %p331 = pneg %p330
    // Predicated region
    $region53: #{sdf_network_forward.1} parent=5 // pred_check
      _
    $region54: #{sdf_network_forward.1} parent=5 // pred_check_branch
      %333 = sbr.rel (%p330) target = $region56
    $region55: #{sdf_network_forward.1} parent=5 // pred_region
      %s334 = ssub.s32 %s19, 1
      %s335 = smul.u32 32, %s24
      %p336 = scmp.lt.s32.totalorder %s335, 127
      %s337 = scalar_select %p336, %s335, 127
      %s338 = smul.addr %s337, 8
      %s339 = scalar_lea.vmem %s0, %s338
      %p340 = pneg %p45
      %p341 = pneg %p42
      %s342 = smul.u32 32, %s24
      %p343 = scmp.lt.s32.totalorder %s342, 127
      %s344 = scalar_select %p343, %s342, 127
      %s345 = smul.addr %s344, 8
      %s346 = scalar_lea.vmem %s1, %s345
      %p347 = pneg %p71
      %p348 = pneg %p68
      %p349 = pneg %p92
      %p350 = pneg %p89
      %p351 = pneg %p113
      %p352 = pneg %p110
      %p353 = pneg %p134
      %p354 = pneg %p131
      %p355 = pneg %p155
      %p356 = pneg %p152
      %p357 = pneg %p176
      %p358 = pneg %p173
      %p359 = pneg %p197
      %p360 = pneg %p194
      %p361 = pneg %p218
      %p362 = pneg %p215
      %p363 = pneg %p244
      %p364 = pneg %p241
      %s365 = smul.u32 32, %s24
      %p366 = scmp.lt.s32.totalorder %s365, 127
      %s367 = scalar_select %p366, %s365, 127
      %s368 = smul.addr %s367, 8
      %s369 = scalar_lea.vmem %s9, %s368
      %p370 = pneg %p270
      %p371 = pneg %p267
      %s372 = smul.u32 32, %s24
      %p373 = scmp.lt.s32.totalorder %s372, 127
      %s374 = scalar_select %p373, %s372, 127
      %s375 = smul.addr %s374, 4
      %s376 = scalar_lea.vmem %s10, %s375
      %s377 = smul.u32 32, %s24
      %p378 = scmp.lt.s32.totalorder %s377, 127
      %s379 = scalar_select %p378, %s377, 127
      %s380 = smul.addr %s379, 8
      %s381 = scalar_lea.vmem %s0, %s380
      %s382 = smul.u32 32, %s24
      %s383 = smul.u32 32, %s24
      %p384 = scmp.lt.s32.totalorder %s383, 127
      %s385 = scalar_select %p384, %s383, 127
      %s386 = smul.addr %s385, 8
      %s387 = scalar_lea.vmem %s1, %s386
      %s388 = smul.u32 32, %s24
      %s389 = smul.u32 32, %s24
      %p390 = scmp.lt.s32.totalorder %s389, 127
      %s391 = scalar_select %p390, %s389, 127
      %s392 = smul.addr %s391, 8
      %s393 = scalar_lea.vmem %s9, %s392
      %s394 = smul.u32 32, %s24
      %s395 = smul.u32 32, %s24
      %p396 = scmp.lt.s32.totalorder %s395, 127
      %s397 = scalar_select %p396, %s395, 127
      %s398 = smul.addr %s397, 4
      %s399 = scalar_lea.vmem %s10, %s398
      %s400 = smul.u32 32, %s24
      %v402 = vld [vmem:[%s381] sm:$0xff]
      %v403 = vld [vmem:[%s381 + $0x8] sm:$0xff]
      %v404 = vld [vmem:[%s381 + $0x10] sm:$0xff]
      %v405 = vld [vmem:[%s381 + $0x18] sm:$0xff]
      %v406 = vld [vmem:[%s381 + $0x20] sm:$0xff]
      %v407 = vld [vmem:[%s381 + $0x28] sm:$0xff]
      %v408 = vld [vmem:[%s381 + $0x30] sm:$0xff]
      %v409 = vld [vmem:[%s381 + $0x38] sm:$0xff]
      %v410 = vld [vmem:[%s381 + $0x40] sm:$0xff]
      %v411 = vld [vmem:[%s381 + $0x48] sm:$0xff]
      %v412 = vld [vmem:[%s381 + $0x50] sm:$0xff]
      %v413 = vld [vmem:[%s381 + $0x58] sm:$0xff]
      %v414 = vld [vmem:[%s381 + $0x60] sm:$0xff]
      %v415 = vld [vmem:[%s381 + $0x68] sm:$0xff]
      %v416 = vld [vmem:[%s381 + $0x70] sm:$0xff]
      %v417 = vld [vmem:[%s381 + $0x78] sm:$0xff]
      %v418 = vld [vmem:[%s381 + $0x80] sm:$0xff]
      %v419 = vld [vmem:[%s381 + $0x88] sm:$0xff]
      %v420 = vld [vmem:[%s381 + $0x90] sm:$0xff]
      %v421 = vld [vmem:[%s381 + $0x98] sm:$0xff]
      %v422 = vld [vmem:[%s381 + $0xa0] sm:$0xff]
      %v423 = vld [vmem:[%s381 + $0xa8] sm:$0xff]
      %v424 = vld [vmem:[%s381 + $0xb0] sm:$0xff]
      %v425 = vld [vmem:[%s381 + $0xb8] sm:$0xff]
      %v426 = vld [vmem:[%s381 + $0xc0] sm:$0xff]
      %v427 = vld [vmem:[%s381 + $0xc8] sm:$0xff]
      %v428 = vld [vmem:[%s381 + $0xd0] sm:$0xff]
      %v429 = vld [vmem:[%s381 + $0xd8] sm:$0xff]
      %v430 = vld [vmem:[%s381 + $0xe0] sm:$0xff]
      %v431 = vld [vmem:[%s381 + $0xe8] sm:$0xff]
      %v432 = vld [vmem:[%s381 + $0xf0] sm:$0xff]
      %v433 = vld [vmem:[%s381 + $0xf8] sm:$0xff]
      %v434 = vld [vmem:[%s2] sm:$0x7]
      %v435 = vld [vmem:[%s387] sm:$0xff]
      %v436 = vld [vmem:[%s387 + $0x8] sm:$0xff]
      %v437 = vld [vmem:[%s387 + $0x10] sm:$0xff]
      %v438 = vld [vmem:[%s387 + $0x18] sm:$0xff]
      %v439 = vld [vmem:[%s387 + $0x20] sm:$0xff]
      %v440 = vld [vmem:[%s387 + $0x28] sm:$0xff]
      %v441 = vld [vmem:[%s387 + $0x30] sm:$0xff]
      %v442 = vld [vmem:[%s387 + $0x38] sm:$0xff]
      %v443 = vld [vmem:[%s387 + $0x40] sm:$0xff]
      %v444 = vld [vmem:[%s387 + $0x48] sm:$0xff]
      %v445 = vld [vmem:[%s387 + $0x50] sm:$0xff]
      %v446 = vld [vmem:[%s387 + $0x58] sm:$0xff]
      %v447 = vld [vmem:[%s387 + $0x60] sm:$0xff]
      %v448 = vld [vmem:[%s387 + $0x68] sm:$0xff]
      %v449 = vld [vmem:[%s387 + $0x70] sm:$0xff]
      %v450 = vld [vmem:[%s387 + $0x78] sm:$0xff]
      %v451 = vld [vmem:[%s387 + $0x80] sm:$0xff]
      %v452 = vld [vmem:[%s387 + $0x88] sm:$0xff]
      %v453 = vld [vmem:[%s387 + $0x90] sm:$0xff]
      %v454 = vld [vmem:[%s387 + $0x98] sm:$0xff]
      %v455 = vld [vmem:[%s387 + $0xa0] sm:$0xff]
      %v456 = vld [vmem:[%s387 + $0xa8] sm:$0xff]
      %v457 = vld [vmem:[%s387 + $0xb0] sm:$0xff]
      %v458 = vld [vmem:[%s387 + $0xb8] sm:$0xff]
      %v459 = vld [vmem:[%s387 + $0xc0] sm:$0xff]
      %v460 = vld [vmem:[%s387 + $0xc8] sm:$0xff]
      %v461 = vld [vmem:[%s387 + $0xd0] sm:$0xff]
      %v462 = vld [vmem:[%s387 + $0xd8] sm:$0xff]
      %v463 = vld [vmem:[%s387 + $0xe0] sm:$0xff]
      %v464 = vld [vmem:[%s387 + $0xe8] sm:$0xff]
      %v465 = vld [vmem:[%s387 + $0xf0] sm:$0xff]
      %v466 = vld [vmem:[%s387 + $0xf8] sm:$0xff]
      %v467 = vpack.c.bf16 %v436, %v435
      %v468 = vpack.c.bf16 %v438, %v437
      %v469 = vpack.c.bf16 %v440, %v439
      %v470 = vpack.c.bf16 %v442, %v441
      %v471 = vpack.c.bf16 %v444, %v443
      %v472 = vpack.c.bf16 %v446, %v445
      %v473 = vpack.c.bf16 %v448, %v447
      %v474 = vpack.c.bf16 %v450, %v449
      %v475 = vpack.c.bf16 %v452, %v451
      %v476 = vpack.c.bf16 %v454, %v453
      %v477 = vpack.c.bf16 %v456, %v455
      %v478 = vpack.c.bf16 %v458, %v457
      %v479 = vpack.c.bf16 %v460, %v459
      %v480 = vpack.c.bf16 %v462, %v461
      %v481 = vpack.c.bf16 %v464, %v463
      %v482 = vpack.c.bf16 %v466, %v465
      %v483 = vld [vmem:[%s3] sm:$0xf]
      %v484 = vld [vmem:[%s3 + $0x4] sm:$0xf]
      %v485 = vld [vmem:[%s3 + $0x8] sm:$0xf]
      %v486 = vld [vmem:[%s3 + $0xc] sm:$0xf]
      %v491 = vunpack.c.l.b16 %v483
      %v492 = vunpack.c.l.b16 %v484
      %v493 = vunpack.c.l.b16 %v485
      %v494 = vunpack.c.l.b16 %v486
      %v495 = vpack.c.b16 %v492, %v491
      %v496 = vpack.c.b16 %v494, %v493
      %vm499 = vcmask 261120
      %v501 = vsel %vm499, %v467, 0
      %v504 = vsel %vm499, %v468, 0
      %v507 = vsel %vm499, %v469, 0
      %v510 = vsel %vm499, %v470, 0
      %v513 = vsel %vm499, %v471, 0
      %v516 = vsel %vm499, %v472, 0
      %v519 = vsel %vm499, %v473, 0
      %v522 = vsel %vm499, %v474, 0
      %v525 = vsel %vm499, %v475, 0
      %v528 = vsel %vm499, %v476, 0
      %v531 = vsel %vm499, %v477, 0
      %v534 = vsel %vm499, %v478, 0
      %v537 = vsel %vm499, %v479, 0
      %v540 = vsel %vm499, %v480, 0
      %v543 = vsel %vm499, %v481, 0
      %v546 = vsel %vm499, %v482, 0
      %548 = vmatprep.subr.bf16.mxu0 0
      %549 = vmatpush1.bf16.msra.mxu0 %v495
      %550 = vmatprep.subr.bf16.mxu0 0
      %551 = vmatpush1.bf16.msra.mxu0 %v496
      %552 = vmatprep.subr.bf16.mxu0 0
      %553 = vmatpush1.bf16.msra.mxu0 0
      %554 = vmatprep.subr.bf16.mxu0 0
      %555 = vmatpush1.bf16.msra.mxu0 0
      %556 = vmatprep.subr.bf16.mxu0 0
      %557 = vmatpush1.bf16.msra.mxu0 0
      %558 = vmatprep.subr.bf16.mxu0 0
      %559 = vmatpush1.bf16.msra.mxu0 0
      %560 = vmatprep.subr.bf16.mxu0 0
      %561 = vmatpush1.bf16.msra.mxu0 0
      %562 = vmatprep.subr.bf16.mxu0 0
      %563 = vmatpush1.bf16.msra.mxu0 0
      %564 = vmatprep.subr.bf16.mxu0 0
      %565 = vmatpush1.bf16.msra.mxu0 0
      %566 = vmatprep.subr.bf16.mxu0 0
      %567 = vmatpush1.bf16.msra.mxu0 0
      %568 = vmatprep.subr.bf16.mxu0 0
      %569 = vmatpush1.bf16.msra.mxu0 0
      %570 = vmatprep.subr.bf16.mxu0 0
      %571 = vmatpush1.bf16.msra.mxu0 0
      %572 = vmatprep.subr.bf16.mxu0 0
      %573 = vmatpush1.bf16.msra.mxu0 0
      %574 = vmatprep.subr.bf16.mxu0 0
      %575 = vmatpush1.bf16.msra.mxu0 0
      %576 = vmatprep.subr.bf16.mxu0 0
      %577 = vmatpush1.bf16.msra.mxu0 0
      %578 = vmatprep.subr.bf16.mxu0 0
      %579 = vmatpush1.bf16.msra.mxu0 0
      %580 = vmatprep.mubr.bf16.mxu0 0
      %581 = vmatmul.mubr.bf16.gmra.mrb[0].mxu0 %v501
      %v582 = vpop.f32.mrb[0].mxu0
      %v583 = vadd.f32 0.0, %v582
      %v584 = vpop.f32.mrb[0].mxu0
      %v585 = vpop.f32.mrb[0].mxu0
      %v586 = vadd.f32 0.0, %v585
      %v587 = vpop.f32.mrb[0].mxu0
      %588 = vmatprep.mubr.bf16.mxu0 0
      %589 = vmatmul.mubr.bf16.gmra.mrb[0].mxu0 %v504
      %v590 = vpop.f32.mrb[0].mxu0
      %v591 = vadd.f32 0.0, %v590
      %v592 = vpop.f32.mrb[0].mxu0
      %v593 = vpop.f32.mrb[0].mxu0
      %v594 = vadd.f32 0.0, %v593
      %v595 = vpop.f32.mrb[0].mxu0
      %596 = vmatprep.mubr.bf16.mxu0 0
      %597 = vmatmul.mubr.bf16.gmra.mrb[0].mxu0 %v507
      %v598 = vpop.f32.mrb[0].mxu0
      %v599 = vadd.f32 0.0, %v598
      %v600 = vpop.f32.mrb[0].mxu0
      %v601 = vpop.f32.mrb[0].mxu0
      %v602 = vadd.f32 0.0, %v601
      %v603 = vpop.f32.mrb[0].mxu0
      %604 = vmatprep.mubr.bf16.mxu0 0
      %605 = vmatmul.mubr.bf16.gmra.mrb[0].mxu0 %v510
      %v606 = vpop.f32.mrb[0].mxu0
      %v607 = vadd.f32 0.0, %v606
      %v608 = vpop.f32.mrb[0].mxu0
      %v609 = vpop.f32.mrb[0].mxu0
      %v610 = vadd.f32 0.0, %v609
      %v611 = vpop.f32.mrb[0].mxu0
      %612 = vmatprep.mubr.bf16.mxu0 0
      %613 = vmatmul.mubr.bf16.gmra.mrb[0].mxu0 %v513
      %v614 = vpop.f32.mrb[0].mxu0
      %v615 = vadd.f32 0.0, %v614
      %v616 = vpop.f32.mrb[0].mxu0
      %v617 = vpop.f32.mrb[0].mxu0
      %v618 = vadd.f32 0.0, %v617
      %v619 = vpop.f32.mrb[0].mxu0
      %620 = vmatprep.mubr.bf16.mxu0 0
      %621 = vmatmul.mubr.bf16.gmra.mrb[0].mxu0 %v516
      %v622 = vpop.f32.mrb[0].mxu0
      %v623 = vadd.f32 0.0, %v622
      %v624 = vpop.f32.mrb[0].mxu0
      %v625 = vpop.f32.mrb[0].mxu0
      %v626 = vadd.f32 0.0, %v625
      %v627 = vpop.f32.mrb[0].mxu0
      %628 = vmatprep.mubr.bf16.mxu0 0
      %629 = vmatmul.mubr.bf16.gmra.mrb[0].mxu0 %v519
      %v630 = vpop.f32.mrb[0].mxu0
      %v631 = vadd.f32 0.0, %v630
      %v632 = vpop.f32.mrb[0].mxu0
      %v633 = vpop.f32.mrb[0].mxu0
      %v634 = vadd.f32 0.0, %v633
      %v635 = vpop.f32.mrb[0].mxu0
      %636 = vmatprep.mubr.bf16.mxu0 0
      %637 = vmatmul.mubr.bf16.gmra.mrb[0].mxu0 %v522
      %v638 = vpop.f32.mrb[0].mxu0
      %v639 = vadd.f32 0.0, %v638
      %v640 = vpop.f32.mrb[0].mxu0
      %v641 = vpop.f32.mrb[0].mxu0
      %v642 = vadd.f32 0.0, %v641
      %v643 = vpop.f32.mrb[0].mxu0
      %644 = vmatprep.mubr.bf16.mxu0 0
      %645 = vmatmul.mubr.bf16.gmra.mrb[0].mxu0 %v525
      %v646 = vpop.f32.mrb[0].mxu0
      %v647 = vadd.f32 0.0, %v646
      %v648 = vpop.f32.mrb[0].mxu0
      %v649 = vpop.f32.mrb[0].mxu0
      %v650 = vadd.f32 0.0, %v649
      %v651 = vpop.f32.mrb[0].mxu0
      %652 = vmatprep.mubr.bf16.mxu0 0
      %653 = vmatmul.mubr.bf16.gmra.mrb[0].mxu0 %v528
      %v654 = vpop.f32.mrb[0].mxu0
      %v655 = vadd.f32 0.0, %v654
      %v656 = vpop.f32.mrb[0].mxu0
      %v657 = vpop.f32.mrb[0].mxu0
      %v658 = vadd.f32 0.0, %v657
      %v659 = vpop.f32.mrb[0].mxu0
      %660 = vmatprep.mubr.bf16.mxu0 0
      %661 = vmatmul.mubr.bf16.gmra.mrb[0].mxu0 %v531
      %v662 = vpop.f32.mrb[0].mxu0
      %v663 = vadd.f32 0.0, %v662
      %v664 = vpop.f32.mrb[0].mxu0
      %v665 = vpop.f32.mrb[0].mxu0
      %v666 = vadd.f32 0.0, %v665
      %v667 = vpop.f32.mrb[0].mxu0
      %668 = vmatprep.mubr.bf16.mxu0 0
      %669 = vmatmul.mubr.bf16.gmra.mrb[0].mxu0 %v534
      %v670 = vpop.f32.mrb[0].mxu0
      %v671 = vadd.f32 0.0, %v670
      %v672 = vpop.f32.mrb[0].mxu0
      %v673 = vpop.f32.mrb[0].mxu0
      %v674 = vadd.f32 0.0, %v673
      %v675 = vpop.f32.mrb[0].mxu0
      %676 = vmatprep.mubr.bf16.mxu0 0
      %677 = vmatmul.mubr.bf16.gmra.mrb[0].mxu0 %v537
      %v678 = vpop.f32.mrb[0].mxu0
      %v679 = vadd.f32 0.0, %v678
      %v680 = vpop.f32.mrb[0].mxu0
      %v681 = vpop.f32.mrb[0].mxu0
      %v682 = vadd.f32 0.0, %v681
      %v683 = vpop.f32.mrb[0].mxu0
      %684 = vmatprep.mubr.bf16.mxu0 0
      %685 = vmatmul.mubr.bf16.gmra.mrb[0].mxu0 %v540
      %v686 = vpop.f32.mrb[0].mxu0
      %v687 = vadd.f32 0.0, %v686
      %v688 = vpop.f32.mrb[0].mxu0
      %v689 = vpop.f32.mrb[0].mxu0
      %v690 = vadd.f32 0.0, %v689
      %v691 = vpop.f32.mrb[0].mxu0
      %692 = vmatprep.mubr.bf16.mxu0 0
      %693 = vmatmul.mubr.bf16.gmra.mrb[0].mxu0 %v543
      %v694 = vpop.f32.mrb[0].mxu0
      %v695 = vadd.f32 0.0, %v694
      %v696 = vpop.f32.mrb[0].mxu0
      %v697 = vpop.f32.mrb[0].mxu0
      %v698 = vadd.f32 0.0, %v697
      %v699 = vpop.f32.mrb[0].mxu0
      %700 = vmatprep.mubr.bf16.mxu0 0
      %701 = vmatmul.mubr.bf16.gmra.mrb[0].mxu0 %v546
      %v702 = vpop.f32.mrb[0].mxu0
      %v703 = vadd.f32 0.0, %v702
      %v704 = vpop.f32.mrb[0].mxu0
      %v705 = vpop.f32.mrb[0].mxu0
      %v706 = vadd.f32 0.0, %v705
      %v707 = vpop.f32.mrb[0].mxu0
      %708 = vdwg.mxu0
      %vm709 = vcmask 23552
      %v711 = vsel %vm709, %v402, 0
      %v714 = vsel %vm709, %v403, 0
      %v717 = vsel %vm709, %v404, 0
      %v720 = vsel %vm709, %v405, 0
      %v723 = vsel %vm709, %v406, 0
      %v726 = vsel %vm709, %v407, 0
      %v729 = vsel %vm709, %v408, 0
      %v732 = vsel %vm709, %v409, 0
      %v735 = vsel %vm709, %v410, 0
      %v738 = vsel %vm709, %v411, 0
      %v741 = vsel %vm709, %v412, 0
      %v744 = vsel %vm709, %v413, 0
      %v747 = vsel %vm709, %v414, 0
      %v750 = vsel %vm709, %v415, 0
      %v753 = vsel %vm709, %v416, 0
      %v756 = vsel %vm709, %v417, 0
      %v759 = vsel %vm709, %v418, 0
      %v762 = vsel %vm709, %v419, 0
      %v765 = vsel %vm709, %v420, 0
      %v768 = vsel %vm709, %v421, 0
      %v771 = vsel %vm709, %v422, 0
      %v774 = vsel %vm709, %v423, 0
      %v777 = vsel %vm709, %v424, 0
      %v780 = vsel %vm709, %v425, 0
      %v783 = vsel %vm709, %v426, 0
      %v786 = vsel %vm709, %v427, 0
      %v789 = vsel %vm709, %v428, 0
      %v792 = vsel %vm709, %v429, 0
      %v795 = vsel %vm709, %v430, 0
      %v798 = vsel %vm709, %v431, 0
      %v801 = vsel %vm709, %v432, 0
      %v804 = vsel %vm709, %v433, 0
      %vm806 = vcmask 1042432
      %v808 = vsel %vm806, %v434, 0
      %810 = vmatprep.subr.mxu0 0.0
      %811 = vmatpush1.msra.mxu0 %v808
      %812 = vmatprep.subr.mxu0 0.0
      %813 = vmatpush1.msra.mxu0 0.0
      %814 = vmatprep.subr.mxu0 0.0
      %815 = vmatpush1.msra.mxu0 0.0
      %816 = vmatprep.subr.mxu0 0.0
      %817 = vmatpush1.msra.mxu0 0.0
      %818 = vmatprep.subr.mxu0 0.0
      %819 = vmatpush1.msra.mxu0 0.0
      %820 = vmatprep.subr.mxu0 0.0
      %821 = vmatpush1.msra.mxu0 0.0
      %822 = vmatprep.subr.mxu0 0.0
      %823 = vmatpush1.msra.mxu0 0.0
      %824 = vmatprep.subr.mxu0 0.0
      %825 = vmatpush1.msra.mxu0 0.0
      %826 = vmatprep.subr.mxu0 0.0
      %827 = vmatpush1.msra.mxu0 0.0
      %828 = vmatprep.subr.mxu0 0.0
      %829 = vmatpush1.msra.mxu0 0.0
      %830 = vmatprep.subr.mxu0 0.0
      %831 = vmatpush1.msra.mxu0 0.0
      %832 = vmatprep.subr.mxu0 0.0
      %833 = vmatpush1.msra.mxu0 0.0
      %834 = vmatprep.subr.mxu0 0.0
      %835 = vmatpush1.msra.mxu0 0.0
      %836 = vmatprep.subr.mxu0 0.0
      %837 = vmatpush1.msra.mxu0 0.0
      %838 = vmatprep.subr.mxu0 0.0
      %839 = vmatpush1.msra.mxu0 0.0
      %840 = vmatprep.subr.mxu0 0.0
      %841 = vmatpush1.msra.mxu0 0.0
      %842 = vmatprep.subr.mxu0 0.0
      %843 = vmatpush1.msra.mxu0 0.0
      %844 = vmatprep.subr.mxu0 0.0
      %845 = vmatpush1.msra.mxu0 0.0
      %846 = vmatprep.subr.mxu0 0.0
      %847 = vmatpush1.msra.mxu0 0.0
      %848 = vmatprep.subr.mxu0 0.0
      %849 = vmatpush1.msra.mxu0 0.0
      %850 = vmatprep.subr.mxu0 0.0
      %851 = vmatpush1.msra.mxu0 0.0
      %852 = vmatprep.subr.mxu0 0.0
      %853 = vmatpush1.msra.mxu0 0.0
      %854 = vmatprep.subr.mxu0 0.0
      %855 = vmatpush1.msra.mxu0 0.0
      %856 = vmatprep.subr.mxu0 0.0
      %857 = vmatpush1.msra.mxu0 0.0
      %858 = vmatprep.subr.mxu0 0.0
      %859 = vmatpush1.msra.mxu0 0.0
      %860 = vmatprep.subr.mxu0 0.0
      %861 = vmatpush1.msra.mxu0 0.0
      %862 = vmatprep.subr.mxu0 0.0
      %863 = vmatpush1.msra.mxu0 0.0
      %864 = vmatprep.subr.mxu0 0.0
      %865 = vmatpush1.msra.mxu0 0.0
      %866 = vmatprep.subr.mxu0 0.0
      %867 = vmatpush1.msra.mxu0 0.0
      %868 = vmatprep.subr.mxu0 0.0
      %869 = vmatpush1.msra.mxu0 0.0
      %870 = vmatprep.subr.mxu0 0.0
      %871 = vmatpush1.msra.mxu0 0.0
      %872 = vmatprep.subr.mxu0 0.0
      %873 = vmatpush1.msra.mxu0 0.0
      %874 = vmatprep.mubr.f32.mxu0 0.0
      %875 = vmatmul.mubr.f32.gmra.mrb[0].mxu0 %v711
      %v876 = vpop.f32.mrb[0].mxu0
      %v877 = vadd.f32 %v583, %v876
      %v878 = vpop.f32.mrb[0].mxu0
      %879 = vmatprep.mubr.f32.mxu0 0.0
      %880 = vmatmul.mubr.f32.gmra.mrb[0].mxu0 %v714
      %v881 = vpop.f32.mrb[0].mxu0
      %v882 = vadd.f32 %v586, %v881
      %v883 = vpop.f32.mrb[0].mxu0
      %884 = vmatprep.mubr.f32.mxu0 0.0
      %885 = vmatmul.mubr.f32.gmra.mrb[0].mxu0 %v717
      %v886 = vpop.f32.mrb[0].mxu0
      %v887 = vadd.f32 %v591, %v886
      %v888 = vpop.f32.mrb[0].mxu0
      %889 = vmatprep.mubr.f32.mxu0 0.0
      %890 = vmatmul.mubr.f32.gmra.mrb[0].mxu0 %v720
      %v891 = vpop.f32.mrb[0].mxu0
      %v892 = vadd.f32 %v594, %v891
      %v893 = vpop.f32.mrb[0].mxu0
      %894 = vmatprep.mubr.f32.mxu0 0.0
      %895 = vmatmul.mubr.f32.gmra.mrb[0].mxu0 %v723
      %v896 = vpop.f32.mrb[0].mxu0
      %v897 = vadd.f32 %v599, %v896
      %v898 = vpop.f32.mrb[0].mxu0
      %899 = vmatprep.mubr.f32.mxu0 0.0
      %900 = vmatmul.mubr.f32.gmra.mrb[0].mxu0 %v726
      %v901 = vpop.f32.mrb[0].mxu0
      %v902 = vadd.f32 %v602, %v901
      %v903 = vpop.f32.mrb[0].mxu0
      %904 = vmatprep.mubr.f32.mxu0 0.0
      %905 = vmatmul.mubr.f32.gmra.mrb[0].mxu0 %v729
      %v906 = vpop.f32.mrb[0].mxu0
      %v907 = vadd.f32 %v607, %v906
      %v908 = vpop.f32.mrb[0].mxu0
      %909 = vmatprep.mubr.f32.mxu0 0.0
      %910 = vmatmul.mubr.f32.gmra.mrb[0].mxu0 %v732
      %v911 = vpop.f32.mrb[0].mxu0
      %v912 = vadd.f32 %v610, %v911
      %v913 = vpop.f32.mrb[0].mxu0
      %914 = vmatprep.mubr.f32.mxu0 0.0
      %915 = vmatmul.mubr.f32.gmra.mrb[0].mxu0 %v735
      %v916 = vpop.f32.mrb[0].mxu0
      %v917 = vadd.f32 %v615, %v916
      %v918 = vpop.f32.mrb[0].mxu0
      %919 = vmatprep.mubr.f32.mxu0 0.0
      %920 = vmatmul.mubr.f32.gmra.mrb[0].mxu0 %v738
      %v921 = vpop.f32.mrb[0].mxu0
      %v922 = vadd.f32 %v618, %v921
      %v923 = vpop.f32.mrb[0].mxu0
      %924 = vmatprep.mubr.f32.mxu0 0.0
      %925 = vmatmul.mubr.f32.gmra.mrb[0].mxu0 %v741
      %v926 = vpop.f32.mrb[0].mxu0
      %v927 = vadd.f32 %v623, %v926
      %v928 = vpop.f32.mrb[0].mxu0
      %929 = vmatprep.mubr.f32.mxu0 0.0
      %930 = vmatmul.mubr.f32.gmra.mrb[0].mxu0 %v744
      %v931 = vpop.f32.mrb[0].mxu0
      %v932 = vadd.f32 %v626, %v931
      %v933 = vpop.f32.mrb[0].mxu0
      %934 = vmatprep.mubr.f32.mxu0 0.0
      %935 = vmatmul.mubr.f32.gmra.mrb[0].mxu0 %v747
      %v936 = vpop.f32.mrb[0].mxu0
      %v937 = vadd.f32 %v631, %v936
      %v938 = vpop.f32.mrb[0].mxu0
      %939 = vmatprep.mubr.f32.mxu0 0.0
      %940 = vmatmul.mubr.f32.gmra.mrb[0].mxu0 %v750
      %v941 = vpop.f32.mrb[0].mxu0
      %v942 = vadd.f32 %v634, %v941
      %v943 = vpop.f32.mrb[0].mxu0
      %944 = vmatprep.mubr.f32.mxu0 0.0
      %945 = vmatmul.mubr.f32.gmra.mrb[0].mxu0 %v753
      %v946 = vpop.f32.mrb[0].mxu0
      %v947 = vadd.f32 %v639, %v946
      %v948 = vpop.f32.mrb[0].mxu0
      %949 = vmatprep.mubr.f32.mxu0 0.0
      %950 = vmatmul.mubr.f32.gmra.mrb[0].mxu0 %v756
      %v951 = vpop.f32.mrb[0].mxu0
      %v952 = vadd.f32 %v642, %v951
      %v953 = vpop.f32.mrb[0].mxu0
      %954 = vmatprep.mubr.f32.mxu0 0.0
      %955 = vmatmul.mubr.f32.gmra.mrb[0].mxu0 %v759
      %v956 = vpop.f32.mrb[0].mxu0
      %v957 = vadd.f32 %v647, %v956
      %v958 = vpop.f32.mrb[0].mxu0
      %959 = vmatprep.mubr.f32.mxu0 0.0
      %960 = vmatmul.mubr.f32.gmra.mrb[0].mxu0 %v762
      %v961 = vpop.f32.mrb[0].mxu0
      %v962 = vadd.f32 %v650, %v961
      %v963 = vpop.f32.mrb[0].mxu0
      %964 = vmatprep.mubr.f32.mxu0 0.0
      %965 = vmatmul.mubr.f32.gmra.mrb[0].mxu0 %v765
      %v966 = vpop.f32.mrb[0].mxu0
      %v967 = vadd.f32 %v655, %v966
      %v968 = vpop.f32.mrb[0].mxu0
      %969 = vmatprep.mubr.f32.mxu0 0.0
      %970 = vmatmul.mubr.f32.gmra.mrb[0].mxu0 %v768
      %v971 = vpop.f32.mrb[0].mxu0
      %v972 = vadd.f32 %v658, %v971
      %v973 = vpop.f32.mrb[0].mxu0
      %974 = vmatprep.mubr.f32.mxu0 0.0
      %975 = vmatmul.mubr.f32.gmra.mrb[0].mxu0 %v771
      %v976 = vpop.f32.mrb[0].mxu0
      %v977 = vadd.f32 %v663, %v976
      %v978 = vpop.f32.mrb[0].mxu0
      %979 = vmatprep.mubr.f32.mxu0 0.0
      %980 = vmatmul.mubr.f32.gmra.mrb[0].mxu0 %v774
      %v981 = vpop.f32.mrb[0].mxu0
      %v982 = vadd.f32 %v666, %v981
      %v983 = vpop.f32.mrb[0].mxu0
      %984 = vmatprep.mubr.f32.mxu0 0.0
      %985 = vmatmul.mubr.f32.gmra.mrb[0].mxu0 %v777
      %v986 = vpop.f32.mrb[0].mxu0
      %v987 = vadd.f32 %v671, %v986
      %v988 = vpop.f32.mrb[0].mxu0
      %989 = vmatprep.mubr.f32.mxu0 0.0
      %990 = vmatmul.mubr.f32.gmra.mrb[0].mxu0 %v780
      %v991 = vpop.f32.mrb[0].mxu0
      %v992 = vadd.f32 %v674, %v991
      %v993 = vpop.f32.mrb[0].mxu0
      %994 = vmatprep.mubr.f32.mxu0 0.0
      %995 = vmatmul.mubr.f32.gmra.mrb[0].mxu0 %v783
      %v996 = vpop.f32.mrb[0].mxu0
      %v997 = vadd.f32 %v679, %v996
      %v998 = vpop.f32.mrb[0].mxu0
      %999 = vmatprep.mubr.f32.mxu0 0.0
      %1000 = vmatmul.mubr.f32.gmra.mrb[0].mxu0 %v786
      %v1001 = vpop.f32.mrb[0].mxu0
      %v1002 = vadd.f32 %v682, %v1001
      %v1003 = vpop.f32.mrb[0].mxu0
      %1004 = vmatprep.mubr.f32.mxu0 0.0
      %1005 = vmatmul.mubr.f32.gmra.mrb[0].mxu0 %v789
      %v1006 = vpop.f32.mrb[0].mxu0
      %v1007 = vadd.f32 %v687, %v1006
      %v1008 = vpop.f32.mrb[0].mxu0
      %1009 = vmatprep.mubr.f32.mxu0 0.0
      %1010 = vmatmul.mubr.f32.gmra.mrb[0].mxu0 %v792
      %v1011 = vpop.f32.mrb[0].mxu0
      %v1012 = vadd.f32 %v690, %v1011
      %v1013 = vpop.f32.mrb[0].mxu0
      %1014 = vmatprep.mubr.f32.mxu0 0.0
      %1015 = vmatmul.mubr.f32.gmra.mrb[0].mxu0 %v795
      %v1016 = vpop.f32.mrb[0].mxu0
      %v1017 = vadd.f32 %v695, %v1016
      %v1018 = vpop.f32.mrb[0].mxu0
      %1019 = vmatprep.mubr.f32.mxu0 0.0
      %1020 = vmatmul.mubr.f32.gmra.mrb[0].mxu0 %v798
      %v1021 = vpop.f32.mrb[0].mxu0
      %v1022 = vadd.f32 %v698, %v1021
      %v1023 = vpop.f32.mrb[0].mxu0
      %1024 = vmatprep.mubr.f32.mxu0 0.0
      %1025 = vmatmul.mubr.f32.gmra.mrb[0].mxu0 %v801
      %v1026 = vpop.f32.mrb[0].mxu0
      %v1027 = vadd.f32 %v703, %v1026
      %v1028 = vpop.f32.mrb[0].mxu0
      %1029 = vmatprep.mubr.f32.mxu0 0.0
      %1030 = vmatmul.mubr.f32.gmra.mrb[0].mxu0 %v804
      %v1031 = vpop.f32.mrb[0].mxu0
      %v1032 = vadd.f32 %v706, %v1031
      %v1033 = vpop.f32.mrb[0].mxu0
      %1034 = vdwg.mxu0
      %v1035 = vld [vmem:[%s4] sm:$0x1]
      %v1037 = vlaneseq
      %v1038 = vshrl.u32 %v1037, 7
      %v1039 = vsub.s32 0, %v1038
      %v1040 = vrot.slane %v1035, %v1039
      %v1042 = vadd.f32 %v877, %v1040
      %v1043 = vadd.f32 %v882, %v1040
      %v1044 = vadd.f32 %v887, %v1040
      %v1045 = vadd.f32 %v892, %v1040
      %v1046 = vadd.f32 %v897, %v1040
      %v1047 = vadd.f32 %v902, %v1040
      %v1048 = vadd.f32 %v907, %v1040
      %v1049 = vadd.f32 %v912, %v1040
      %v1050 = vadd.f32 %v917, %v1040
      %v1051 = vadd.f32 %v922, %v1040
      %v1052 = vadd.f32 %v927, %v1040
      %v1053 = vadd.f32 %v932, %v1040
      %v1054 = vadd.f32 %v937, %v1040
      %v1055 = vadd.f32 %v942, %v1040
      %v1056 = vadd.f32 %v947, %v1040
      %v1057 = vadd.f32 %v952, %v1040
      %v1058 = vadd.f32 %v957, %v1040
      %v1059 = vadd.f32 %v962, %v1040
      %v1060 = vadd.f32 %v967, %v1040
      %v1061 = vadd.f32 %v972, %v1040
      %v1062 = vadd.f32 %v977, %v1040
      %v1063 = vadd.f32 %v982, %v1040
      %v1064 = vadd.f32 %v987, %v1040
      %v1065 = vadd.f32 %v992, %v1040
      %v1066 = vadd.f32 %v997, %v1040
      %v1067 = vadd.f32 %v1002, %v1040
      %v1068 = vadd.f32 %v1007, %v1040
      %v1069 = vadd.f32 %v1012, %v1040
      %v1070 = vadd.f32 %v1017, %v1040
      %v1071 = vadd.f32 %v1022, %v1040
      %v1072 = vadd.f32 %v1027, %v1040
      %v1073 = vadd.f32 %v1032, %v1040
      %v1074 = vmul.f32 %v1042, 100.0
      %v1075 = vmul.f32 %v1043, 100.0
      %v1076 = vmul.f32 %v1044, 100.0
      %v1077 = vmul.f32 %v1045, 100.0
      %v1078 = vmul.f32 %v1046, 100.0
      %v1079 = vmul.f32 %v1047, 100.0
      %v1080 = vmul.f32 %v1048, 100.0
      %v1081 = vmul.f32 %v1049, 100.0
      %v1082 = vmul.f32 %v1050, 100.0
      %v1083 = vmul.f32 %v1051, 100.0
      %v1084 = vmul.f32 %v1052, 100.0
      %v1085 = vmul.f32 %v1053, 100.0
      %v1086 = vmul.f32 %v1054, 100.0
      %v1087 = vmul.f32 %v1055, 100.0
      %v1088 = vmul.f32 %v1056, 100.0
      %v1089 = vmul.f32 %v1057, 100.0
      %v1090 = vmul.f32 %v1058, 100.0
      %v1091 = vmul.f32 %v1059, 100.0
      %v1092 = vmul.f32 %v1060, 100.0
      %v1093 = vmul.f32 %v1061, 100.0
      %v1094 = vmul.f32 %v1062, 100.0
      %v1095 = vmul.f32 %v1063, 100.0
      %v1096 = vmul.f32 %v1064, 100.0
      %v1097 = vmul.f32 %v1065, 100.0
      %v1098 = vmul.f32 %v1066, 100.0
      %v1099 = vmul.f32 %v1067, 100.0
      %v1100 = vmul.f32 %v1068, 100.0
      %v1101 = vmul.f32 %v1069, 100.0
      %v1102 = vmul.f32 %v1070, 100.0
      %v1103 = vmul.f32 %v1071, 100.0
      %v1104 = vmul.f32 %v1072, 100.0
      %v1105 = vmul.f32 %v1073, 100.0
      %v1106 = vmin.f32 %v1074, 20.0
      %v1107 = vmin.f32 %v1075, 20.0
      %v1108 = vmin.f32 %v1076, 20.0
      %v1109 = vmin.f32 %v1077, 20.0
      %v1110 = vmin.f32 %v1078, 20.0
      %v1111 = vmin.f32 %v1079, 20.0
      %v1112 = vmin.f32 %v1080, 20.0
      %v1113 = vmin.f32 %v1081, 20.0
      %v1114 = vmin.f32 %v1082, 20.0
      %v1115 = vmin.f32 %v1083, 20.0
      %v1116 = vmin.f32 %v1084, 20.0
      %v1117 = vmin.f32 %v1085, 20.0
      %v1118 = vmin.f32 %v1086, 20.0
      %v1119 = vmin.f32 %v1087, 20.0
      %v1120 = vmin.f32 %v1088, 20.0
      %v1121 = vmin.f32 %v1089, 20.0
      %v1122 = vmin.f32 %v1090, 20.0
      %v1123 = vmin.f32 %v1091, 20.0
      %v1124 = vmin.f32 %v1092, 20.0
      %v1125 = vmin.f32 %v1093, 20.0
      %v1126 = vmin.f32 %v1094, 20.0
      %v1127 = vmin.f32 %v1095, 20.0
      %v1128 = vmin.f32 %v1096, 20.0
      %v1129 = vmin.f32 %v1097, 20.0
      %v1130 = vmin.f32 %v1098, 20.0
      %v1131 = vmin.f32 %v1099, 20.0
      %v1132 = vmin.f32 %v1100, 20.0
      %v1133 = vmin.f32 %v1101, 20.0
      %v1134 = vmin.f32 %v1102, 20.0
      %v1135 = vmin.f32 %v1103, 20.0
      %v1136 = vmin.f32 %v1104, 20.0
      %v1137 = vmin.f32 %v1105, 20.0
      %v1138 = vmul.f32 %v1106, 1.442695
      %v1139 = vpow.pop %v1138
      %v1140 = vmul.f32 %v1107, 1.442695
      %v1141 = vpow.pop %v1140
      %v1142 = vmul.f32 %v1108, 1.442695
      %v1143 = vpow.pop %v1142
      %v1144 = vmul.f32 %v1109, 1.442695
      %v1145 = vpow.pop %v1144
      %v1146 = vmul.f32 %v1110, 1.442695
      %v1147 = vpow.pop %v1146
      %v1148 = vmul.f32 %v1111, 1.442695
      %v1149 = vpow.pop %v1148
      %v1150 = vmul.f32 %v1112, 1.442695
      %v1151 = vpow.pop %v1150
      %v1152 = vmul.f32 %v1113, 1.442695
      %v1153 = vpow.pop %v1152
      %v1154 = vmul.f32 %v1114, 1.442695
      %v1155 = vpow.pop %v1154
      %v1156 = vmul.f32 %v1115, 1.442695
      %v1157 = vpow.pop %v1156
      %v1158 = vmul.f32 %v1116, 1.442695
      %v1159 = vpow.pop %v1158
      %v1160 = vmul.f32 %v1117, 1.442695
      %v1161 = vpow.pop %v1160
      %v1162 = vmul.f32 %v1118, 1.442695
      %v1163 = vpow.pop %v1162
      %v1164 = vmul.f32 %v1119, 1.442695
      %v1165 = vpow.pop %v1164
      %v1166 = vmul.f32 %v1120, 1.442695
      %v1167 = vpow.pop %v1166
      %v1168 = vmul.f32 %v1121, 1.442695
      %v1169 = vpow.pop %v1168
      %v1170 = vmul.f32 %v1122, 1.442695
      %v1171 = vpow.pop %v1170
      %v1172 = vmul.f32 %v1123, 1.442695
      %v1173 = vpow.pop %v1172
      %v1174 = vmul.f32 %v1124, 1.442695
      %v1175 = vpow.pop %v1174
      %v1176 = vmul.f32 %v1125, 1.442695
      %v1177 = vpow.pop %v1176
      %v1178 = vmul.f32 %v1126, 1.442695
      %v1179 = vpow.pop %v1178
      %v1180 = vmul.f32 %v1127, 1.442695
      %v1181 = vpow.pop %v1180
      %v1182 = vmul.f32 %v1128, 1.442695
      %v1183 = vpow.pop %v1182
      %v1184 = vmul.f32 %v1129, 1.442695
      %v1185 = vpow.pop %v1184
      %v1186 = vmul.f32 %v1130, 1.442695
      %v1187 = vpow.pop %v1186
      %v1188 = vmul.f32 %v1131, 1.442695
      %v1189 = vpow.pop %v1188
      %v1190 = vmul.f32 %v1132, 1.442695
      %v1191 = vpow.pop %v1190
      %v1192 = vmul.f32 %v1133, 1.442695
      %v1193 = vpow.pop %v1192
      %v1194 = vmul.f32 %v1134, 1.442695
      %v1195 = vpow.pop %v1194
      %v1196 = vmul.f32 %v1135, 1.442695
      %v1197 = vpow.pop %v1196
      %v1198 = vmul.f32 %v1136, 1.442695
      %v1199 = vpow.pop %v1198
      %v1200 = vmul.f32 %v1137, 1.442695
      %v1201 = vpow.pop %v1200
      %v1202 = vadd.f32 %v1139, 1.0
      %v1203 = vadd.f32 %v1141, 1.0
      %v1204 = vadd.f32 %v1143, 1.0
      %v1205 = vadd.f32 %v1145, 1.0
      %v1206 = vadd.f32 %v1147, 1.0
      %v1207 = vadd.f32 %v1149, 1.0
      %v1208 = vadd.f32 %v1151, 1.0
      %v1209 = vadd.f32 %v1153, 1.0
      %v1210 = vadd.f32 %v1155, 1.0
      %v1211 = vadd.f32 %v1157, 1.0
      %v1212 = vadd.f32 %v1159, 1.0
      %v1213 = vadd.f32 %v1161, 1.0
      %v1214 = vadd.f32 %v1163, 1.0
      %v1215 = vadd.f32 %v1165, 1.0
      %v1216 = vadd.f32 %v1167, 1.0
      %v1217 = vadd.f32 %v1169, 1.0
      %v1218 = vadd.f32 %v1171, 1.0
      %v1219 = vadd.f32 %v1173, 1.0
      %v1220 = vadd.f32 %v1175, 1.0
      %v1221 = vadd.f32 %v1177, 1.0
      %v1222 = vadd.f32 %v1179, 1.0
      %v1223 = vadd.f32 %v1181, 1.0
      %v1224 = vadd.f32 %v1183, 1.0
      %v1225 = vadd.f32 %v1185, 1.0
      %v1226 = vadd.f32 %v1187, 1.0
      %v1227 = vadd.f32 %v1189, 1.0
      %v1228 = vadd.f32 %v1191, 1.0
      %v1229 = vadd.f32 %v1193, 1.0
      %v1230 = vadd.f32 %v1195, 1.0
      %v1231 = vadd.f32 %v1197, 1.0
      %v1232 = vadd.f32 %v1199, 1.0
      %v1233 = vadd.f32 %v1201, 1.0
      %v1234 = vlog2.pop %v1202
      %v1235 = vmul.f32 %v1234, 0.6931472
      %v1236 = vlog2.pop %v1203
      %v1237 = vmul.f32 %v1236, 0.6931472
      %v1238 = vlog2.pop %v1204
      %v1239 = vmul.f32 %v1238, 0.6931472
      %v1240 = vlog2.pop %v1205
      %v1241 = vmul.f32 %v1240, 0.6931472
      %v1242 = vlog2.pop %v1206
      %v1243 = vmul.f32 %v1242, 0.6931472
      %v1244 = vlog2.pop %v1207
      %v1245 = vmul.f32 %v1244, 0.6931472
      %v1246 = vlog2.pop %v1208
      %v1247 = vmul.f32 %v1246, 0.6931472
      %v1248 = vlog2.pop %v1209
      %v1249 = vmul.f32 %v1248, 0.6931472
      %v1250 = vlog2.pop %v1210
      %v1251 = vmul.f32 %v1250, 0.6931472
      %v1252 = vlog2.pop %v1211
      %v1253 = vmul.f32 %v1252, 0.6931472
      %v1254 = vlog2.pop %v1212
      %v1255 = vmul.f32 %v1254, 0.6931472
      %v1256 = vlog2.pop %v1213
      %v1257 = vmul.f32 %v1256, 0.6931472
      %v1258 = vlog2.pop %v1214
      %v1259 = vmul.f32 %v1258, 0.6931472
      %v1260 = vlog2.pop %v1215
      %v1261 = vmul.f32 %v1260, 0.6931472
      %v1262 = vlog2.pop %v1216
      %v1263 = vmul.f32 %v1262, 0.6931472
      %v1264 = vlog2.pop %v1217
      %v1265 = vmul.f32 %v1264, 0.6931472
      %v1266 = vlog2.pop %v1218
      %v1267 = vmul.f32 %v1266, 0.6931472
      %v1268 = vlog2.pop %v1219
      %v1269 = vmul.f32 %v1268, 0.6931472
      %v1270 = vlog2.pop %v1220
      %v1271 = vmul.f32 %v1270, 0.6931472
      %v1272 = vlog2.pop %v1221
      %v1273 = vmul.f32 %v1272, 0.6931472
      %v1274 = vlog2.pop %v1222
      %v1275 = vmul.f32 %v1274, 0.6931472
      %v1276 = vlog2.pop %v1223
      %v1277 = vmul.f32 %v1276, 0.6931472
      %v1278 = vlog2.pop %v1224
      %v1279 = vmul.f32 %v1278, 0.6931472
      %v1280 = vlog2.pop %v1225
      %v1281 = vmul.f32 %v1280, 0.6931472
      %v1282 = vlog2.pop %v1226
      %v1283 = vmul.f32 %v1282, 0.6931472
      %v1284 = vlog2.pop %v1227
      %v1285 = vmul.f32 %v1284, 0.6931472
      %v1286 = vlog2.pop %v1228
      %v1287 = vmul.f32 %v1286, 0.6931472
      %v1288 = vlog2.pop %v1229
      %v1289 = vmul.f32 %v1288, 0.6931472
      %v1290 = vlog2.pop %v1230
      %v1291 = vmul.f32 %v1290, 0.6931472
      %v1292 = vlog2.pop %v1231
      %v1293 = vmul.f32 %v1292, 0.6931472
      %v1294 = vlog2.pop %v1232
      %v1295 = vmul.f32 %v1294, 0.6931472
      %v1296 = vlog2.pop %v1233
      %v1297 = vmul.f32 %v1296, 0.6931472
      %v1298 = vmul.f32 %v1235, 0.01
      %v1299 = vmul.f32 %v1237, 0.01
      %v1300 = vmul.f32 %v1239, 0.01
      %v1301 = vmul.f32 %v1241, 0.01
      %v1302 = vmul.f32 %v1243, 0.01
      %v1303 = vmul.f32 %v1245, 0.01
      %v1304 = vmul.f32 %v1247, 0.01
      %v1305 = vmul.f32 %v1249, 0.01
      %v1306 = vmul.f32 %v1251, 0.01
      %v1307 = vmul.f32 %v1253, 0.01
      %v1308 = vmul.f32 %v1255, 0.01
      %v1309 = vmul.f32 %v1257, 0.01
      %v1310 = vmul.f32 %v1259, 0.01
      %v1311 = vmul.f32 %v1261, 0.01
      %v1312 = vmul.f32 %v1263, 0.01
      %v1313 = vmul.f32 %v1265, 0.01
      %v1314 = vmul.f32 %v1267, 0.01
      %v1315 = vmul.f32 %v1269, 0.01
      %v1316 = vmul.f32 %v1271, 0.01
      %v1317 = vmul.f32 %v1273, 0.01
      %v1318 = vmul.f32 %v1275, 0.01
      %v1319 = vmul.f32 %v1277, 0.01
      %v1320 = vmul.f32 %v1279, 0.01
      %v1321 = vmul.f32 %v1281, 0.01
      %v1322 = vmul.f32 %v1283, 0.01
      %v1323 = vmul.f32 %v1285, 0.01
      %v1324 = vmul.f32 %v1287, 0.01
      %v1325 = vmul.f32 %v1289, 0.01
      %v1326 = vmul.f32 %v1291, 0.01
      %v1327 = vmul.f32 %v1293, 0.01
      %v1328 = vmul.f32 %v1295, 0.01
      %v1329 = vmul.f32 %v1297, 0.01
      %vm1330 = vcmp.gt.f32.partialorder %v1074, 20.0
      %vm1331 = vcmp.gt.f32.partialorder %v1075, 20.0
      %vm1332 = vcmp.gt.f32.partialorder %v1076, 20.0
      %vm1333 = vcmp.gt.f32.partialorder %v1077, 20.0
      %vm1334 = vcmp.gt.f32.partialorder %v1078, 20.0
      %vm1335 = vcmp.gt.f32.partialorder %v1079, 20.0
      %vm1336 = vcmp.gt.f32.partialorder %v1080, 20.0
      %vm1337 = vcmp.gt.f32.partialorder %v1081, 20.0
      %vm1338 = vcmp.gt.f32.partialorder %v1082, 20.0
      %vm1339 = vcmp.gt.f32.partialorder %v1083, 20.0
      %vm1340 = vcmp.gt.f32.partialorder %v1084, 20.0
      %vm1341 = vcmp.gt.f32.partialorder %v1085, 20.0
      %vm1342 = vcmp.gt.f32.partialorder %v1086, 20.0
      %vm1343 = vcmp.gt.f32.partialorder %v1087, 20.0
      %vm1344 = vcmp.gt.f32.partialorder %v1088, 20.0
      %vm1345 = vcmp.gt.f32.partialorder %v1089, 20.0
      %vm1346 = vcmp.gt.f32.partialorder %v1090, 20.0
      %vm1347 = vcmp.gt.f32.partialorder %v1091, 20.0
      %vm1348 = vcmp.gt.f32.partialorder %v1092, 20.0
      %vm1349 = vcmp.gt.f32.partialorder %v1093, 20.0
      %vm1350 = vcmp.gt.f32.partialorder %v1094, 20.0
      %vm1351 = vcmp.gt.f32.partialorder %v1095, 20.0
      %vm1352 = vcmp.gt.f32.partialorder %v1096, 20.0
      %vm1353 = vcmp.gt.f32.partialorder %v1097, 20.0
      %vm1354 = vcmp.gt.f32.partialorder %v1098, 20.0
      %vm1355 = vcmp.gt.f32.partialorder %v1099, 20.0
      %vm1356 = vcmp.gt.f32.partialorder %v1100, 20.0
      %vm1357 = vcmp.gt.f32.partialorder %v1101, 20.0
      %vm1358 = vcmp.gt.f32.partialorder %v1102, 20.0
      %vm1359 = vcmp.gt.f32.partialorder %v1103, 20.0
      %vm1360 = vcmp.gt.f32.partialorder %v1104, 20.0
      %vm1361 = vcmp.gt.f32.partialorder %v1105, 20.0
      %v1362 = vsel %vm1330, %v1042, %v1298
      %v1363 = vsel %vm1331, %v1043, %v1299
      %v1364 = vsel %vm1332, %v1044, %v1300
      %v1365 = vsel %vm1333, %v1045, %v1301
      %v1366 = vsel %vm1334, %v1046, %v1302
      %v1367 = vsel %vm1335, %v1047, %v1303
      %v1368 = vsel %vm1336, %v1048, %v1304
      %v1369 = vsel %vm1337, %v1049, %v1305
      %v1370 = vsel %vm1338, %v1050, %v1306
      %v1371 = vsel %vm1339, %v1051, %v1307
      %v1372 = vsel %vm1340, %v1052, %v1308
      %v1373 = vsel %vm1341, %v1053, %v1309
      %v1374 = vsel %vm1342, %v1054, %v1310
      %v1375 = vsel %vm1343, %v1055, %v1311
      %v1376 = vsel %vm1344, %v1056, %v1312
      %v1377 = vsel %vm1345, %v1057, %v1313
      %v1378 = vsel %vm1346, %v1058, %v1314
      %v1379 = vsel %vm1347, %v1059, %v1315
      %v1380 = vsel %vm1348, %v1060, %v1316
      %v1381 = vsel %vm1349, %v1061, %v1317
      %v1382 = vsel %vm1350, %v1062, %v1318
      %v1383 = vsel %vm1351, %v1063, %v1319
      %v1384 = vsel %vm1352, %v1064, %v1320
      %v1385 = vsel %vm1353, %v1065, %v1321
      %v1386 = vsel %vm1354, %v1066, %v1322
      %v1387 = vsel %vm1355, %v1067, %v1323
      %v1388 = vsel %vm1356, %v1068, %v1324
      %v1389 = vsel %vm1357, %v1069, %v1325
      %v1390 = vsel %vm1358, %v1070, %v1326
      %v1391 = vsel %vm1359, %v1071, %v1327
      %v1392 = vsel %vm1360, %v1072, %v1328
      %v1393 = vsel %vm1361, %v1073, %v1329
      %v1394 = vpack.c.bf16 %v1363, %v1362
      %v1395 = vpack.c.bf16 %v1365, %v1364
      %v1396 = vpack.c.bf16 %v1367, %v1366
      %v1397 = vpack.c.bf16 %v1369, %v1368
      %v1398 = vpack.c.bf16 %v1371, %v1370
      %v1399 = vpack.c.bf16 %v1373, %v1372
      %v1400 = vpack.c.bf16 %v1375, %v1374
      %v1401 = vpack.c.bf16 %v1377, %v1376
      %v1402 = vpack.c.bf16 %v1379, %v1378
      %v1403 = vpack.c.bf16 %v1381, %v1380
      %v1404 = vpack.c.bf16 %v1383, %v1382
      %v1405 = vpack.c.bf16 %v1385, %v1384
      %v1406 = vpack.c.bf16 %v1387, %v1386
      %v1407 = vpack.c.bf16 %v1389, %v1388
      %v1408 = vpack.c.bf16 %v1391, %v1390
      %v1409 = vpack.c.bf16 %v1393, %v1392
      %v1410 = vld [vmem:[%s5] sm:$0xf]
      %v1411 = vld [vmem:[%s5 + $0x4] sm:$0xf]
      %v1412 = vld [vmem:[%s5 + $0x8] sm:$0xf]
      %v1413 = vld [vmem:[%s5 + $0xc] sm:$0xf]
      %v1414 = vld [vmem:[%s5 + $0x10] sm:$0xf]
      %v1415 = vld [vmem:[%s5 + $0x14] sm:$0xf]
      %v1416 = vld [vmem:[%s5 + $0x18] sm:$0xf]
      %v1417 = vld [vmem:[%s5 + $0x1c] sm:$0xf]
      %v1418 = vld [vmem:[%s5 + $0x20] sm:$0xf]
      %v1419 = vld [vmem:[%s5 + $0x24] sm:$0xf]
      %v1420 = vld [vmem:[%s5 + $0x28] sm:$0xf]
      %v1421 = vld [vmem:[%s5 + $0x2c] sm:$0xf]
      %v1422 = vld [vmem:[%s5 + $0x30] sm:$0xf]
      %v1423 = vld [vmem:[%s5 + $0x34] sm:$0xf]
      %v1424 = vld [vmem:[%s5 + $0x38] sm:$0xf]
      %v1425 = vld [vmem:[%s5 + $0x3c] sm:$0xf]
      %v1426 = vld [vmem:[%s7] sm:$0x1]
      %v1428 = vlaneseq
      %v1429 = vshrl.u32 %v1428, 7
      %v1430 = vsub.s32 0, %v1429
      %v1431 = vrot.slane %v1426, %v1430
      %v1449 = vunpack.c.l.b16 %v1410
      %v1450 = vunpack.c.l.b16 %v1411
      %v1451 = vunpack.c.l.b16 %v1412
      %v1452 = vunpack.c.l.b16 %v1413
      %v1453 = vunpack.c.l.b16 %v1414
      %v1454 = vunpack.c.l.b16 %v1415
      %v1455 = vunpack.c.l.b16 %v1416
      %v1456 = vunpack.c.l.b16 %v1417
      %v1457 = vunpack.c.l.b16 %v1418
      %v1458 = vunpack.c.l.b16 %v1419
      %v1459 = vunpack.c.l.b16 %v1420
      %v1460 = vunpack.c.l.b16 %v1421
      %v1461 = vunpack.c.l.b16 %v1422
      %v1462 = vunpack.c.l.b16 %v1423
      %v1463 = vunpack.c.l.b16 %v1424
      %v1464 = vunpack.c.l.b16 %v1425
      %v1465 = vpack.c.b16 %v1450, %v1449
      %v1466 = vpack.c.b16 %v1452, %v1451
      %v1467 = vpack.c.b16 %v1454, %v1453
      %v1468 = vpack.c.b16 %v1456, %v1455
      %v1469 = vpack.c.b16 %v1458, %v1457
      %v1470 = vpack.c.b16 %v1460, %v1459
      %v1471 = vpack.c.b16 %v1462, %v1461
      %v1472 = vpack.c.b16 %v1464, %v1463
      %1481 = vmatprep.subr.bf16.mxu0 0
      %1482 = vmatpush1.bf16.msra.mxu0 %v1465
      %1483 = vmatprep.subr.bf16.mxu0 0
      %1484 = vmatpush1.bf16.msra.mxu0 %v1466
      %1485 = vmatprep.subr.bf16.mxu0 0
      %1486 = vmatpush1.bf16.msra.mxu0 %v1467
      %1487 = vmatprep.subr.bf16.mxu0 0
      %1488 = vmatpush1.bf16.msra.mxu0 %v1468
      %1489 = vmatprep.subr.bf16.mxu0 0
      %1490 = vmatpush1.bf16.msra.mxu0 %v1469
      %1491 = vmatprep.subr.bf16.mxu0 0
      %1492 = vmatpush1.bf16.msra.mxu0 %v1470
      %1493 = vmatprep.subr.bf16.mxu0 0
      %1494 = vmatpush1.bf16.msra.mxu0 %v1471
      %1495 = vmatprep.subr.bf16.mxu0 0
      %1496 = vmatpush1.bf16.msra.mxu0 %v1472
      %1497 = vmatprep.subr.bf16.mxu0 0
      %1498 = vmatpush1.bf16.msra.mxu0 0
      %1499 = vmatprep.subr.bf16.mxu0 0
      %1500 = vmatpush1.bf16.msra.mxu0 0
      %1501 = vmatprep.subr.bf16.mxu0 0
      %1502 = vmatpush1.bf16.msra.mxu0 0
      %1503 = vmatprep.subr.bf16.mxu0 0
      %1504 = vmatpush1.bf16.msra.mxu0 0
      %1505 = vmatprep.subr.bf16.mxu0 0
      %1506 = vmatpush1.bf16.msra.mxu0 0
      %1507 = vmatprep.subr.bf16.mxu0 0
      %1508 = vmatpush1.bf16.msra.mxu0 0
      %1509 = vmatprep.subr.bf16.mxu0 0
      %1510 = vmatpush1.bf16.msra.mxu0 0
      %1511 = vmatprep.subr.bf16.mxu0 0
      %1512 = vmatpush1.bf16.msra.mxu0 0
      %1513 = vmatprep.mubr.bf16.mxu0 0
      %1514 = vmatmul.mubr.bf16.gmra.mrb[0].mxu0 %v1394
      %v1515 = vpop.f32.mrb[0].mxu0
      %v1516 = vadd.f32 %v1431, %v1515
      %v1517 = vpop.f32.mrb[0].mxu0
      %v1518 = vpop.f32.mrb[0].mxu0
      %v1519 = vadd.f32 %v1431, %v1518
      %v1520 = vpop.f32.mrb[0].mxu0
      %1521 = vmatprep.mubr.bf16.mxu0 0
      %1522 = vmatmul.mubr.bf16.gmra.mrb[0].mxu0 %v1395
      %v1523 = vpop.f32.mrb[0].mxu0
      %v1524 = vadd.f32 %v1431, %v1523
      %v1525 = vpop.f32.mrb[0].mxu0
      %v1526 = vpop.f32.mrb[0].mxu0
      %v1527 = vadd.f32 %v1431, %v1526
      %v1528 = vpop.f32.mrb[0].mxu0
      %1529 = vmatprep.mubr.bf16.mxu0 0
      %1530 = vmatmul.mubr.bf16.gmra.mrb[0].mxu0 %v1396
      %v1531 = vpop.f32.mrb[0].mxu0
      %v1532 = vadd.f32 %v1431, %v1531
      %v1533 = vpop.f32.mrb[0].mxu0
      %v1534 = vpop.f32.mrb[0].mxu0
      %v1535 = vadd.f32 %v1431, %v1534
      %v1536 = vpop.f32.mrb[0].mxu0
      %1537 = vmatprep.mubr.bf16.mxu0 0
      %1538 = vmatmul.mubr.bf16.gmra.mrb[0].mxu0 %v1397
      %v1539 = vpop.f32.mrb[0].mxu0
      %v1540 = vadd.f32 %v1431, %v1539
      %v1541 = vpop.f32.mrb[0].mxu0
      %v1542 = vpop.f32.mrb[0].mxu0
      %v1543 = vadd.f32 %v1431, %v1542
      %v1544 = vpop.f32.mrb[0].mxu0
      %1545 = vmatprep.mubr.bf16.mxu0 0
      %1546 = vmatmul.mubr.bf16.gmra.mrb[0].mxu0 %v1398
      %v1547 = vpop.f32.mrb[0].mxu0
      %v1548 = vadd.f32 %v1431, %v1547
      %v1549 = vpop.f32.mrb[0].mxu0
      %v1550 = vpop.f32.mrb[0].mxu0
      %v1551 = vadd.f32 %v1431, %v1550
      %v1552 = vpop.f32.mrb[0].mxu0
      %1553 = vmatprep.mubr.bf16.mxu0 0
      %1554 = vmatmul.mubr.bf16.gmra.mrb[0].mxu0 %v1399
      %v1555 = vpop.f32.mrb[0].mxu0
      %v1556 = vadd.f32 %v1431, %v1555
      %v1557 = vpop.f32.mrb[0].mxu0
      %v1558 = vpop.f32.mrb[0].mxu0
      %v1559 = vadd.f32 %v1431, %v1558
      %v1560 = vpop.f32.mrb[0].mxu0
      %1561 = vmatprep.mubr.bf16.mxu0 0
      %1562 = vmatmul.mubr.bf16.gmra.mrb[0].mxu0 %v1400
      %v1563 = vpop.f32.mrb[0].mxu0
      %v1564 = vadd.f32 %v1431, %v1563
      %v1565 = vpop.f32.mrb[0].mxu0
      %v1566 = vpop.f32.mrb[0].mxu0
      %v1567 = vadd.f32 %v1431, %v1566
      %v1568 = vpop.f32.mrb[0].mxu0
      %1569 = vmatprep.mubr.bf16.mxu0 0
      %1570 = vmatmul.mubr.bf16.gmra.mrb[0].mxu0 %v1401
      %v1571 = vpop.f32.mrb[0].mxu0
      %v1572 = vadd.f32 %v1431, %v1571
      %v1573 = vpop.f32.mrb[0].mxu0
      %v1574 = vpop.f32.mrb[0].mxu0
      %v1575 = vadd.f32 %v1431, %v1574
      %v1576 = vpop.f32.mrb[0].mxu0
      %1577 = vmatprep.mubr.bf16.mxu0 0
      %1578 = vmatmul.mubr.bf16.gmra.mrb[0].mxu0 %v1402
      %v1579 = vpop.f32.mrb[0].mxu0
      %v1580 = vadd.f32 %v1431, %v1579
      %v1581 = vpop.f32.mrb[0].mxu0
      %v1582 = vpop.f32.mrb[0].mxu0
      %v1583 = vadd.f32 %v1431, %v1582
      %v1584 = vpop.f32.mrb[0].mxu0
      %1585 = vmatprep.mubr.bf16.mxu0 0
      %1586 = vmatmul.mubr.bf16.gmra.mrb[0].mxu0 %v1403
      %v1587 = vpop.f32.mrb[0].mxu0
      %v1588 = vadd.f32 %v1431, %v1587
      %v1589 = vpop.f32.mrb[0].mxu0
      %v1590 = vpop.f32.mrb[0].mxu0
      %v1591 = vadd.f32 %v1431, %v1590
      %v1592 = vpop.f32.mrb[0].mxu0
      %1593 = vmatprep.mubr.bf16.mxu0 0
      %1594 = vmatmul.mubr.bf16.gmra.mrb[0].mxu0 %v1404
      %v1595 = vpop.f32.mrb[0].mxu0
      %v1596 = vadd.f32 %v1431, %v1595
      %v1597 = vpop.f32.mrb[0].mxu0
      %v1598 = vpop.f32.mrb[0].mxu0
      %v1599 = vadd.f32 %v1431, %v1598
      %v1600 = vpop.f32.mrb[0].mxu0
      %1601 = vmatprep.mubr.bf16.mxu0 0
      %1602 = vmatmul.mubr.bf16.gmra.mrb[0].mxu0 %v1405
      %v1603 = vpop.f32.mrb[0].mxu0
      %v1604 = vadd.f32 %v1431, %v1603
      %v1605 = vpop.f32.mrb[0].mxu0
      %v1606 = vpop.f32.mrb[0].mxu0
      %v1607 = vadd.f32 %v1431, %v1606
      %v1608 = vpop.f32.mrb[0].mxu0
      %1609 = vmatprep.mubr.bf16.mxu0 0
      %1610 = vmatmul.mubr.bf16.gmra.mrb[0].mxu0 %v1406
      %v1611 = vpop.f32.mrb[0].mxu0
      %v1612 = vadd.f32 %v1431, %v1611
      %v1613 = vpop.f32.mrb[0].mxu0
      %v1614 = vpop.f32.mrb[0].mxu0
      %v1615 = vadd.f32 %v1431, %v1614
      %v1616 = vpop.f32.mrb[0].mxu0
      %1617 = vmatprep.mubr.bf16.mxu0 0
      %1618 = vmatmul.mubr.bf16.gmra.mrb[0].mxu0 %v1407
      %v1619 = vpop.f32.mrb[0].mxu0
      %v1620 = vadd.f32 %v1431, %v1619
      %v1621 = vpop.f32.mrb[0].mxu0
      %v1622 = vpop.f32.mrb[0].mxu0
      %v1623 = vadd.f32 %v1431, %v1622
      %v1624 = vpop.f32.mrb[0].mxu0
      %1625 = vmatprep.mubr.bf16.mxu0 0
      %1626 = vmatmul.mubr.bf16.gmra.mrb[0].mxu0 %v1408
      %v1627 = vpop.f32.mrb[0].mxu0
      %v1628 = vadd.f32 %v1431, %v1627
      %v1629 = vpop.f32.mrb[0].mxu0
      %v1630 = vpop.f32.mrb[0].mxu0
      %v1631 = vadd.f32 %v1431, %v1630
      %v1632 = vpop.f32.mrb[0].mxu0
      %1633 = vmatprep.mubr.bf16.mxu0 0
      %1634 = vmatmul.mubr.bf16.gmra.mrb[0].mxu0 %v1409
      %v1635 = vpop.f32.mrb[0].mxu0
      %v1636 = vadd.f32 %v1431, %v1635
      %v1637 = vpop.f32.mrb[0].mxu0
      %v1638 = vpop.f32.mrb[0].mxu0
      %v1639 = vadd.f32 %v1431, %v1638
      %v1640 = vpop.f32.mrb[0].mxu0
      %1641 = vdwg.mxu0
      %v1642 = vld [vmem:[%s6] sm:$0xf]
      %v1643 = vld [vmem:[%s6 + $0x4] sm:$0xf]
      %v1644 = vld [vmem:[%s6 + $0x8] sm:$0xf]
      %v1645 = vld [vmem:[%s6 + $0xc] sm:$0xf]
      %v1646 = vld [vmem:[%s6 + $0x10] sm:$0xf]
      %v1647 = vld [vmem:[%s6 + $0x14] sm:$0xf]
      %v1648 = vld [vmem:[%s6 + $0x18] sm:$0xf]
      %v1649 = vld [vmem:[%s6 + $0x1c] sm:$0xf]
      %v1650 = vld [vmem:[%s6 + $0x20] sm:$0xf]
      %v1651 = vld [vmem:[%s6 + $0x24] sm:$0xf]
      %v1652 = vld [vmem:[%s6 + $0x28] sm:$0xf]
      %v1653 = vld [vmem:[%s6 + $0x2c] sm:$0xf]
      %v1654 = vld [vmem:[%s6 + $0x30] sm:$0xf]
      %v1655 = vld [vmem:[%s6 + $0x34] sm:$0xf]
      %v1656 = vld [vmem:[%s6 + $0x38] sm:$0xf]
      %v1657 = vld [vmem:[%s6 + $0x3c] sm:$0xf]
      %v1658 = vld [vmem:[#allocation2] sm:$0x1]
      %v1660 = vlaneseq
      %v1661 = vshrl.u32 %v1660, 7
      %v1662 = vsub.s32 0, %v1661
      %v1663 = vrot.slane %v1658, %v1662
      %v1681 = vunpack.c.l.b16 %v1642
      %v1682 = vunpack.c.l.b16 %v1643
      %v1683 = vunpack.c.l.b16 %v1644
      %v1684 = vunpack.c.l.b16 %v1645
      %v1685 = vunpack.c.l.b16 %v1646
      %v1686 = vunpack.c.l.b16 %v1647
      %v1687 = vunpack.c.l.b16 %v1648
      %v1688 = vunpack.c.l.b16 %v1649
      %v1689 = vunpack.c.l.b16 %v1650
      %v1690 = vunpack.c.l.b16 %v1651
      %v1691 = vunpack.c.l.b16 %v1652
      %v1692 = vunpack.c.l.b16 %v1653
      %v1693 = vunpack.c.l.b16 %v1654
      %v1694 = vunpack.c.l.b16 %v1655
      %v1695 = vunpack.c.l.b16 %v1656
      %v1696 = vunpack.c.l.b16 %v1657
      %v1697 = vpack.c.b16 %v1682, %v1681
      %v1698 = vpack.c.b16 %v1684, %v1683
      %v1699 = vpack.c.b16 %v1686, %v1685
      %v1700 = vpack.c.b16 %v1688, %v1687
      %v1701 = vpack.c.b16 %v1690, %v1689
      %v1702 = vpack.c.b16 %v1692, %v1691
      %v1703 = vpack.c.b16 %v1694, %v1693
      %v1704 = vpack.c.b16 %v1696, %v1695
      %1713 = vmatprep.subr.bf16.mxu0 0
      %1714 = vmatpush1.bf16.msra.mxu0 %v1697
      %1715 = vmatprep.subr.bf16.mxu0 0
      %1716 = vmatpush1.bf16.msra.mxu0 %v1698
      %1717 = vmatprep.subr.bf16.mxu0 0
      %1718 = vmatpush1.bf16.msra.mxu0 %v1699
      %1719 = vmatprep.subr.bf16.mxu0 0
      %1720 = vmatpush1.bf16.msra.mxu0 %v1700
      %1721 = vmatprep.subr.bf16.mxu0 0
      %1722 = vmatpush1.bf16.msra.mxu0 %v1701
      %1723 = vmatprep.subr.bf16.mxu0 0
      %1724 = vmatpush1.bf16.msra.mxu0 %v1702
      %1725 = vmatprep.subr.bf16.mxu0 0
      %1726 = vmatpush1.bf16.msra.mxu0 %v1703
      %1727 = vmatprep.subr.bf16.mxu0 0
      %1728 = vmatpush1.bf16.msra.mxu0 %v1704
      %1729 = vmatprep.subr.bf16.mxu0 0
      %1730 = vmatpush1.bf16.msra.mxu0 0
      %1731 = vmatprep.subr.bf16.mxu0 0
      %1732 = vmatpush1.bf16.msra.mxu0 0
      %1733 = vmatprep.subr.bf16.mxu0 0
      %1734 = vmatpush1.bf16.msra.mxu0 0
      %1735 = vmatprep.subr.bf16.mxu0 0
      %1736 = vmatpush1.bf16.msra.mxu0 0
      %1737 = vmatprep.subr.bf16.mxu0 0
      %1738 = vmatpush1.bf16.msra.mxu0 0
      %1739 = vmatprep.subr.bf16.mxu0 0
      %1740 = vmatpush1.bf16.msra.mxu0 0
      %1741 = vmatprep.subr.bf16.mxu0 0
      %1742 = vmatpush1.bf16.msra.mxu0 0
      %1743 = vmatprep.subr.bf16.mxu0 0
      %1744 = vmatpush1.bf16.msra.mxu0 0
      %1745 = vmatprep.mubr.bf16.mxu0 0
      %1746 = vmatmul.mubr.bf16.gmra.mrb[0].mxu0 %v1394
      %v1747 = vpop.f32.mrb[0].mxu0
      %v1748 = vadd.f32 %v1663, %v1747
      %v1749 = vpop.f32.mrb[0].mxu0
      %v1750 = vpop.f32.mrb[0].mxu0
      %v1751 = vadd.f32 %v1663, %v1750
      %v1752 = vpop.f32.mrb[0].mxu0
      %1753 = vmatprep.mubr.bf16.mxu0 0
      %1754 = vmatmul.mubr.bf16.gmra.mrb[0].mxu0 %v1395
      %v1755 = vpop.f32.mrb[0].mxu0
      %v1756 = vadd.f32 %v1663, %v1755
      %v1757 = vpop.f32.mrb[0].mxu0
      %v1758 = vpop.f32.mrb[0].mxu0
      %v1759 = vadd.f32 %v1663, %v1758
      %v1760 = vpop.f32.mrb[0].mxu0
      %1761 = vmatprep.mubr.bf16.mxu0 0
      %1762 = vmatmul.mubr.bf16.gmra.mrb[0].mxu0 %v1396
      %v1763 = vpop.f32.mrb[0].mxu0
      %v1764 = vadd.f32 %v1663, %v1763
      %v1765 = vpop.f32.mrb[0].mxu0
      %v1766 = vpop.f32.mrb[0].mxu0
      %v1767 = vadd.f32 %v1663, %v1766
      %v1768 = vpop.f32.mrb[0].mxu0
      %1769 = vmatprep.mubr.bf16.mxu0 0
      %1770 = vmatmul.mubr.bf16.gmra.mrb[0].mxu0 %v1397
      %v1771 = vpop.f32.mrb[0].mxu0
      %v1772 = vadd.f32 %v1663, %v1771
      %v1773 = vpop.f32.mrb[0].mxu0
      %v1774 = vpop.f32.mrb[0].mxu0
      %v1775 = vadd.f32 %v1663, %v1774
      %v1776 = vpop.f32.mrb[0].mxu0
      %1777 = vmatprep.mubr.bf16.mxu0 0
      %1778 = vmatmul.mubr.bf16.gmra.mrb[0].mxu0 %v1398
      %v1779 = vpop.f32.mrb[0].mxu0
      %v1780 = vadd.f32 %v1663, %v1779
      %v1781 = vpop.f32.mrb[0].mxu0
      %v1782 = vpop.f32.mrb[0].mxu0
      %v1783 = vadd.f32 %v1663, %v1782
      %v1784 = vpop.f32.mrb[0].mxu0
      %1785 = vmatprep.mubr.bf16.mxu0 0
      %1786 = vmatmul.mubr.bf16.gmra.mrb[0].mxu0 %v1399
      %v1787 = vpop.f32.mrb[0].mxu0
      %v1788 = vadd.f32 %v1663, %v1787
      %v1789 = vpop.f32.mrb[0].mxu0
      %v1790 = vpop.f32.mrb[0].mxu0
      %v1791 = vadd.f32 %v1663, %v1790
      %v1792 = vpop.f32.mrb[0].mxu0
      %1793 = vmatprep.mubr.bf16.mxu0 0
      %1794 = vmatmul.mubr.bf16.gmra.mrb[0].mxu0 %v1400
      %v1795 = vpop.f32.mrb[0].mxu0
      %v1796 = vadd.f32 %v1663, %v1795
      %v1797 = vpop.f32.mrb[0].mxu0
      %v1798 = vpop.f32.mrb[0].mxu0
      %v1799 = vadd.f32 %v1663, %v1798
      %v1800 = vpop.f32.mrb[0].mxu0
      %1801 = vmatprep.mubr.bf16.mxu0 0
      %1802 = vmatmul.mubr.bf16.gmra.mrb[0].mxu0 %v1401
      %v1803 = vpop.f32.mrb[0].mxu0
      %v1804 = vadd.f32 %v1663, %v1803
      %v1805 = vpop.f32.mrb[0].mxu0
      %v1806 = vpop.f32.mrb[0].mxu0
      %v1807 = vadd.f32 %v1663, %v1806
      %v1808 = vpop.f32.mrb[0].mxu0
      %1809 = vmatprep.mubr.bf16.mxu0 0
      %1810 = vmatmul.mubr.bf16.gmra.mrb[0].mxu0 %v1402
      %v1811 = vpop.f32.mrb[0].mxu0
      %v1812 = vadd.f32 %v1663, %v1811
      %v1813 = vpop.f32.mrb[0].mxu0
      %v1814 = vpop.f32.mrb[0].mxu0
      %v1815 = vadd.f32 %v1663, %v1814
      %v1816 = vpop.f32.mrb[0].mxu0
      %1817 = vmatprep.mubr.bf16.mxu0 0
      %1818 = vmatmul.mubr.bf16.gmra.mrb[0].mxu0 %v1403
      %v1819 = vpop.f32.mrb[0].mxu0
      %v1820 = vadd.f32 %v1663, %v1819
      %v1821 = vpop.f32.mrb[0].mxu0
      %v1822 = vpop.f32.mrb[0].mxu0
      %v1823 = vadd.f32 %v1663, %v1822
      %v1824 = vpop.f32.mrb[0].mxu0
      %1825 = vmatprep.mubr.bf16.mxu0 0
      %1826 = vmatmul.mubr.bf16.gmra.mrb[0].mxu0 %v1404
      %v1827 = vpop.f32.mrb[0].mxu0
      %v1828 = vadd.f32 %v1663, %v1827
      %v1829 = vpop.f32.mrb[0].mxu0
      %v1830 = vpop.f32.mrb[0].mxu0
      %v1831 = vadd.f32 %v1663, %v1830
      %v1832 = vpop.f32.mrb[0].mxu0
      %1833 = vmatprep.mubr.bf16.mxu0 0
      %1834 = vmatmul.mubr.bf16.gmra.mrb[0].mxu0 %v1405
      %v1835 = vpop.f32.mrb[0].mxu0
      %v1836 = vadd.f32 %v1663, %v1835
      %v1837 = vpop.f32.mrb[0].mxu0
      %v1838 = vpop.f32.mrb[0].mxu0
      %v1839 = vadd.f32 %v1663, %v1838
      %v1840 = vpop.f32.mrb[0].mxu0
      %1841 = vmatprep.mubr.bf16.mxu0 0
      %1842 = vmatmul.mubr.bf16.gmra.mrb[0].mxu0 %v1406
      %v1843 = vpop.f32.mrb[0].mxu0
      %v1844 = vadd.f32 %v1663, %v1843
      %v1845 = vpop.f32.mrb[0].mxu0
      %v1846 = vpop.f32.mrb[0].mxu0
      %v1847 = vadd.f32 %v1663, %v1846
      %v1848 = vpop.f32.mrb[0].mxu0
      %1849 = vmatprep.mubr.bf16.mxu0 0
      %1850 = vmatmul.mubr.bf16.gmra.mrb[0].mxu0 %v1407
      %v1851 = vpop.f32.mrb[0].mxu0
      %v1852 = vadd.f32 %v1663, %v1851
      %v1853 = vpop.f32.mrb[0].mxu0
      %v1854 = vpop.f32.mrb[0].mxu0
      %v1855 = vadd.f32 %v1663, %v1854
      %v1856 = vpop.f32.mrb[0].mxu0
      %1857 = vmatprep.mubr.bf16.mxu0 0
      %1858 = vmatmul.mubr.bf16.gmra.mrb[0].mxu0 %v1408
      %v1859 = vpop.f32.mrb[0].mxu0
      %v1860 = vadd.f32 %v1663, %v1859
      %v1861 = vpop.f32.mrb[0].mxu0
      %v1862 = vpop.f32.mrb[0].mxu0
      %v1863 = vadd.f32 %v1663, %v1862
      %v1864 = vpop.f32.mrb[0].mxu0
      %1865 = vmatprep.mubr.bf16.mxu0 0
      %1866 = vmatmul.mubr.bf16.gmra.mrb[0].mxu0 %v1409
      %v1867 = vpop.f32.mrb[0].mxu0
      %v1868 = vadd.f32 %v1663, %v1867
      %v1869 = vpop.f32.mrb[0].mxu0
      %v1870 = vpop.f32.mrb[0].mxu0
      %v1871 = vadd.f32 %v1663, %v1870
      %v1872 = vpop.f32.mrb[0].mxu0
      %1873 = vdwg.mxu0
      %v1874 = vpack.c.bf16 %v1519, %v1516
      %v1875 = vpack.c.bf16 %v1527, %v1524
      %v1876 = vpack.c.bf16 %v1535, %v1532
      %v1877 = vpack.c.bf16 %v1543, %v1540
      %v1878 = vpack.c.bf16 %v1551, %v1548
      %v1879 = vpack.c.bf16 %v1559, %v1556
      %v1880 = vpack.c.bf16 %v1567, %v1564
      %v1881 = vpack.c.bf16 %v1575, %v1572
      %v1882 = vpack.c.bf16 %v1583, %v1580
      %v1883 = vpack.c.bf16 %v1591, %v1588
      %v1884 = vpack.c.bf16 %v1599, %v1596
      %v1885 = vpack.c.bf16 %v1607, %v1604
      %v1886 = vpack.c.bf16 %v1615, %v1612
      %v1887 = vpack.c.bf16 %v1623, %v1620
      %v1888 = vpack.c.bf16 %v1631, %v1628
      %v1889 = vpack.c.bf16 %v1639, %v1636
      %v1906 = vunpack.c.l.b16 %v1874
      %v1907 = vunpack.c.h.b16 %v1874
      %v1908 = vunpack.c.l.b16 %v1875
      %v1909 = vunpack.c.h.b16 %v1875
      %v1910 = vunpack.c.l.b16 %v1876
      %v1911 = vunpack.c.h.b16 %v1876
      %v1912 = vunpack.c.l.b16 %v1877
      %v1913 = vunpack.c.h.b16 %v1877
      %v1914 = vunpack.c.l.b16 %v1878
      %v1915 = vunpack.c.h.b16 %v1878
      %v1916 = vunpack.c.l.b16 %v1879
      %v1917 = vunpack.c.h.b16 %v1879
      %v1918 = vunpack.c.l.b16 %v1880
      %v1919 = vunpack.c.h.b16 %v1880
      %v1920 = vunpack.c.l.b16 %v1881
      %v1921 = vunpack.c.h.b16 %v1881
      %v1922 = vunpack.c.l.b16 %v1882
      %v1923 = vunpack.c.h.b16 %v1882
      %v1924 = vunpack.c.l.b16 %v1883
      %v1925 = vunpack.c.h.b16 %v1883
      %v1926 = vunpack.c.l.b16 %v1884
      %v1927 = vunpack.c.h.b16 %v1884
      %v1928 = vunpack.c.l.b16 %v1885
      %v1929 = vunpack.c.h.b16 %v1885
      %v1930 = vunpack.c.l.b16 %v1886
      %v1931 = vunpack.c.h.b16 %v1886
      %v1932 = vunpack.c.l.b16 %v1887
      %v1933 = vunpack.c.h.b16 %v1887
      %v1934 = vunpack.c.l.b16 %v1888
      %v1935 = vunpack.c.h.b16 %v1888
      %v1936 = vunpack.c.l.b16 %v1889
      %v1937 = vunpack.c.h.b16 %v1889
      %v1938 = vpack.c.b16 %v1906, %v1906
      %v1939 = vpack.c.b16 %v1907, %v1907
      %v1940 = vpack.c.b16 %v1908, %v1908
      %v1941 = vpack.c.b16 %v1909, %v1909
      %v1942 = vpack.c.b16 %v1910, %v1910
      %v1943 = vpack.c.b16 %v1911, %v1911
      %v1944 = vpack.c.b16 %v1912, %v1912
      %v1945 = vpack.c.b16 %v1913, %v1913
      %v1946 = vpack.c.b16 %v1914, %v1914
      %v1947 = vpack.c.b16 %v1915, %v1915
      %v1948 = vpack.c.b16 %v1916, %v1916
      %v1949 = vpack.c.b16 %v1917, %v1917
      %v1950 = vpack.c.b16 %v1918, %v1918
      %v1951 = vpack.c.b16 %v1919, %v1919
      %v1952 = vpack.c.b16 %v1920, %v1920
      %v1953 = vpack.c.b16 %v1921, %v1921
      %v1954 = vpack.c.b16 %v1922, %v1922
      %v1955 = vpack.c.b16 %v1923, %v1923
      %v1956 = vpack.c.b16 %v1924, %v1924
      %v1957 = vpack.c.b16 %v1925, %v1925
      %v1958 = vpack.c.b16 %v1926, %v1926
      %v1959 = vpack.c.b16 %v1927, %v1927
      %v1960 = vpack.c.b16 %v1928, %v1928
      %v1961 = vpack.c.b16 %v1929, %v1929
      %v1962 = vpack.c.b16 %v1930, %v1930
      %v1963 = vpack.c.b16 %v1931, %v1931
      %v1964 = vpack.c.b16 %v1932, %v1932
      %v1965 = vpack.c.b16 %v1933, %v1933
      %v1966 = vpack.c.b16 %v1934, %v1934
      %v1967 = vpack.c.b16 %v1935, %v1935
      %v1968 = vpack.c.b16 %v1936, %v1936
      %v1969 = vpack.c.b16 %v1937, %v1937
      %2002 = vst [vmem:[%s399] sm:$0xf] %v1938
      %2003 = vst [vmem:[%s399 + $0x4] sm:$0xf] %v1939
      %2004 = vst [vmem:[%s399 + $0x8] sm:$0xf] %v1940
      %2005 = vst [vmem:[%s399 + $0xc] sm:$0xf] %v1941
      %2006 = vst [vmem:[%s399 + $0x10] sm:$0xf] %v1942
      %2007 = vst [vmem:[%s399 + $0x14] sm:$0xf] %v1943
      %2008 = vst [vmem:[%s399 + $0x18] sm:$0xf] %v1944
      %2009 = vst [vmem:[%s399 + $0x1c] sm:$0xf] %v1945
      %2010 = vst [vmem:[%s399 + $0x20] sm:$0xf] %v1946
      %2011 = vst [vmem:[%s399 + $0x24] sm:$0xf] %v1947
      %2012 = vst [vmem:[%s399 + $0x28] sm:$0xf] %v1948
      %2013 = vst [vmem:[%s399 + $0x2c] sm:$0xf] %v1949
      %2014 = vst [vmem:[%s399 + $0x30] sm:$0xf] %v1950
      %2015 = vst [vmem:[%s399 + $0x34] sm:$0xf] %v1951
      %2016 = vst [vmem:[%s399 + $0x38] sm:$0xf] %v1952
      %2017 = vst [vmem:[%s399 + $0x3c] sm:$0xf] %v1953
      %2018 = vst [vmem:[%s399 + $0x40] sm:$0xf] %v1954
      %2019 = vst [vmem:[%s399 + $0x44] sm:$0xf] %v1955
      %2020 = vst [vmem:[%s399 + $0x48] sm:$0xf] %v1956
      %2021 = vst [vmem:[%s399 + $0x4c] sm:$0xf] %v1957
      %2022 = vst [vmem:[%s399 + $0x50] sm:$0xf] %v1958
      %2023 = vst [vmem:[%s399 + $0x54] sm:$0xf] %v1959
      %2024 = vst [vmem:[%s399 + $0x58] sm:$0xf] %v1960
      %2025 = vst [vmem:[%s399 + $0x5c] sm:$0xf] %v1961
      %2026 = vst [vmem:[%s399 + $0x60] sm:$0xf] %v1962
      %2027 = vst [vmem:[%s399 + $0x64] sm:$0xf] %v1963
      %2028 = vst [vmem:[%s399 + $0x68] sm:$0xf] %v1964
      %2029 = vst [vmem:[%s399 + $0x6c] sm:$0xf] %v1965
      %2030 = vst [vmem:[%s399 + $0x70] sm:$0xf] %v1966
      %2031 = vst [vmem:[%s399 + $0x74] sm:$0xf] %v1967
      %2032 = vst [vmem:[%s399 + $0x78] sm:$0xf] %v1968
      %2033 = vst [vmem:[%s399 + $0x7c] sm:$0xf] %v1969
      %vm2034 = vcmask 7168
      %2035 = vst.msk [vmem:[%s393] sm:$0xff] %vm2034, %v1748
      %2036 = vst.msk [vmem:[%s393 + $0x8] sm:$0xff] %vm2034, %v1751
      %2037 = vst.msk [vmem:[%s393 + $0x10] sm:$0xff] %vm2034, %v1756
      %2038 = vst.msk [vmem:[%s393 + $0x18] sm:$0xff] %vm2034, %v1759
      %2039 = vst.msk [vmem:[%s393 + $0x20] sm:$0xff] %vm2034, %v1764
      %2040 = vst.msk [vmem:[%s393 + $0x28] sm:$0xff] %vm2034, %v1767
      %2041 = vst.msk [vmem:[%s393 + $0x30] sm:$0xff] %vm2034, %v1772
      %2042 = vst.msk [vmem:[%s393 + $0x38] sm:$0xff] %vm2034, %v1775
      %2043 = vst.msk [vmem:[%s393 + $0x40] sm:$0xff] %vm2034, %v1780
      %2044 = vst.msk [vmem:[%s393 + $0x48] sm:$0xff] %vm2034, %v1783
      %2045 = vst.msk [vmem:[%s393 + $0x50] sm:$0xff] %vm2034, %v1788
      %2046 = vst.msk [vmem:[%s393 + $0x58] sm:$0xff] %vm2034, %v1791
      %2047 = vst.msk [vmem:[%s393 + $0x60] sm:$0xff] %vm2034, %v1796
      %2048 = vst.msk [vmem:[%s393 + $0x68] sm:$0xff] %vm2034, %v1799
      %2049 = vst.msk [vmem:[%s393 + $0x70] sm:$0xff] %vm2034, %v1804
      %2050 = vst.msk [vmem:[%s393 + $0x78] sm:$0xff] %vm2034, %v1807
      %2051 = vst.msk [vmem:[%s393 + $0x80] sm:$0xff] %vm2034, %v1812
      %2052 = vst.msk [vmem:[%s393 + $0x88] sm:$0xff] %vm2034, %v1815
      %2053 = vst.msk [vmem:[%s393 + $0x90] sm:$0xff] %vm2034, %v1820
      %2054 = vst.msk [vmem:[%s393 + $0x98] sm:$0xff] %vm2034, %v1823
      %2055 = vst.msk [vmem:[%s393 + $0xa0] sm:$0xff] %vm2034, %v1828
      %2056 = vst.msk [vmem:[%s393 + $0xa8] sm:$0xff] %vm2034, %v1831
      %2057 = vst.msk [vmem:[%s393 + $0xb0] sm:$0xff] %vm2034, %v1836
      %2058 = vst.msk [vmem:[%s393 + $0xb8] sm:$0xff] %vm2034, %v1839
      %2059 = vst.msk [vmem:[%s393 + $0xc0] sm:$0xff] %vm2034, %v1844
      %2060 = vst.msk [vmem:[%s393 + $0xc8] sm:$0xff] %vm2034, %v1847
      %2061 = vst.msk [vmem:[%s393 + $0xd0] sm:$0xff] %vm2034, %v1852
      %2062 = vst.msk [vmem:[%s393 + $0xd8] sm:$0xff] %vm2034, %v1855
      %2063 = vst.msk [vmem:[%s393 + $0xe0] sm:$0xff] %vm2034, %v1860
      %2064 = vst.msk [vmem:[%s393 + $0xe8] sm:$0xff] %vm2034, %v1863
      %2065 = vst.msk [vmem:[%s393 + $0xf0] sm:$0xff] %vm2034, %v1868
      %2066 = vst.msk [vmem:[%s393 + $0xf8] sm:$0xff] %vm2034, %v1871
      %s2067 = smul.u32 32, %s24
      %p2068 = scmp.lt.s32.totalorder %s2067, 127
      %s2069 = scalar_select %p2068, %s2067, 127
      %s2070 = smul.addr %s2069, 8
      %s2071 = scalar_lea.vmem %s9, %s2070
      %s2072 = smul.u32 32, %s24
      %p2073 = scmp.lt.s32.totalorder %s2072, 127
      %s2074 = scalar_select %p2073, %s2072, 127
      %s2075 = smul.addr %s2074, 4
      %s2076 = scalar_lea.vmem %s10, %s2075
      // Predicated region
      $region57: #{sdf_network_forward.1} parent=55 // pred_check
        %p2077 = pneg %p241
      $region58: #{sdf_network_forward.1} parent=55 // pred_check_branch
        %2079 = sbr.rel (%p2077) target = $region60
      $region59: #{sdf_network_forward.1} parent=55 // pred_region
        %s2080 = smul.u32 32, %s24
      $region60: #{sdf_network_forward.1} parent=55 // pred_fallthru
        _
      // Predicated region
      $region61: #{sdf_network_forward.1} parent=55 // pred_check
        %p2081 = pneg %p267
      $region62: #{sdf_network_forward.1} parent=55 // pred_check_branch
        %2083 = sbr.rel (%p2081) target = $region64
      $region63: #{sdf_network_forward.1} parent=55 // pred_region
        %s2084 = smul.u32 32, %s24
      $region64: #{sdf_network_forward.1} parent=55 // pred_fallthru
        _
    $region56: #{sdf_network_forward.1} parent=5 // pred_fallthru
      _
    %p2085 = scmp.le.s32.totalorder 2, %s19
    // Predicated region
    $region65: #{sdf_network_forward.1} parent=5 // pred_check
      %p2086 = pneg %p2085
    $region66: #{sdf_network_forward.1} parent=5 // pred_check_branch
      %2088 = sbr.rel (%p2086) target = $region68
    $region67: #{sdf_network_forward.1} parent=5 // pred_region
      %s2089 = ssub.s32 %s19, 2
      // Predicated region
      $region69: #{sdf_network_forward.1} parent=67 // pred_check
        %p2090 = pneg %p247
      $region70: #{sdf_network_forward.1} parent=67 // pred_check_branch
        %2092 = sbr.rel (%p2090) target = $region72
      $region71: #{sdf_network_forward.1} parent=67 // pred_region
        %s2093 = smul.u32 32, %s25
        %p2094 = scmp.lt.s32.totalorder %s2093, 127
        %s2095 = scalar_select %p2094, %s2093, 127
        %s2096 = smul.addr %s2095, 8
        %s2097 = scalar_lea.vmem %s9, %s2096
      $region72: #{sdf_network_forward.1} parent=67 // pred_fallthru
        _
      // Predicated region
      $region73: #{sdf_network_forward.1} parent=67 // pred_check
        %p2098 = pneg %p273
      $region74: #{sdf_network_forward.1} parent=67 // pred_check_branch
        %2100 = sbr.rel (%p2098) target = $region76
      $region75: #{sdf_network_forward.1} parent=67 // pred_region
        %s2101 = smul.u32 32, %s25
        %p2102 = scmp.lt.s32.totalorder %s2101, 127
        %s2103 = scalar_select %p2102, %s2101, 127
        %s2104 = smul.addr %s2103, 4
        %s2105 = scalar_lea.vmem %s10, %s2104
      $region76: #{sdf_network_forward.1} parent=67 // pred_fallthru
        _
    $region68: #{sdf_network_forward.1} parent=5 // pred_fallthru
      _
  $region6: #{sdf_network_forward.1} parent=0 // loop_footer
    %s23 = sadd.s32 1, %s19
  $region7: #{sdf_network_forward.1} parent=0 // loop_footer_branch
    %18 = sbr.rel target = $region3
  $region8: #{sdf_network_forward.1} parent=0 // loop_exit
    _

</llo_original>
